<compile_context>
chip_gen: v7x
topology: tpu7x:2x2x1
jax: 0.10.0
libtpu: 0.0.40
codegen_flags: <defaults>
</compile_context>

<pallas_src>
import functools

import jax
import jax.numpy as jnp
from jax.experimental import pallas as pl
from jax.experimental.pallas import tpu as pltpu

# th * W element budget for one (th, 4W) f32 input block (~1 MiB): big enough
# to amortize the ~0.35us per-grid-step overhead, small enough to stay well
# inside the default scoped-VMEM limit on v5e/v6e/v7x with double buffering.
_TILE_ROWCOL_ELEMS = 65536


def _cdiv(a, b):
    return -(-a // b)


def _round_th(th, h4):
    """Row-tile size must be a multiple of 8 (block second-minor) or == H/4."""
    if th >= h4:
        return h4
    th = ((th + 7) // 8) * 8
    return th if th < h4 else h4


def _plan_tiles(h4, w, batch):
    """Pick (rows-per-tile th, total row tiles T, reduction splits)."""
    th = _round_th(min(h4, max(8, _TILE_ROWCOL_ELEMS // w)), h4)
    t = _cdiv(h4, th)
    nsplit = 1
    if batch == 1 and h4 > 1:
        # v7x has two TensorCores: with a single batch element, split the
        # row-tile reduction in half (partial moments summed in the wrapper).
        if t < 2 or t % 2:
            target = t + 1 if (t % 2 and t > 1) else 2
            th = _round_th(_cdiv(h4, target), h4)
            t = _cdiv(h4, th)
        if t >= 2 and t % 2 == 0:
            nsplit = 2
    return th, t, nsplit


# ----------------------------------------------------------------------------
# Kernel: per (split, batch) raw weighted moments of the 1/4-res image
#   M_k[a, b] = sum_pixels  w * d^k * i^a * j^b ,  k in {2, 1, 0}, a,b in 0..2
# with w = (plane_est**3) downsampled, d = depth downsampled, (i, j) the
# 1/4-res pixel coordinates.  Intrinsics are applied to the tiny results in
# the wrapper (A = Kinv M2' Kinv^T, left = Kinv v), so the kernel needs no
# per-pixel camera-coordinate math and no pixel-coordinate input at all.
# ----------------------------------------------------------------------------
def _moments_kernel(smat_ref, depth_ref, plane_ref, m2_ref, m1_ref, m0_ref, *,
                    th, w, h4, t_per_split, ragged):
    s = pl.program_id(0)          # reduction split (second core when B == 1)
    t = pl.program_id(2)          # row-tile index within this split
    row_block = s * t_per_split + t

    @pl.when(t == 0)
    def _():
        m2_ref[...] = jnp.zeros_like(m2_ref)
        m1_ref[...] = jnp.zeros_like(m1_ref)
        m0_ref[...] = jnp.zeros_like(m0_ref)

    # Row part of the 4x bilinear downsample: average of full-res sub-rows 1
    # and 2, which the wrapper reshape placed at lane offsets [w, 2w) and
    # [2w, 3w).  plane_est is cubed per full-res pixel *before* averaging.
    d_rows = 0.5 * (depth_ref[:, w:2 * w] + depth_ref[:, 2 * w:3 * w])   # (th, w)
    pa = plane_ref[:, w:2 * w]
    pb = plane_ref[:, 2 * w:3 * w]
    p_rows = 0.5 * (pa * pa * pa + pb * pb * pb)                          # (th, w)

    if ragged:
        # The last tile hangs off the bottom of the image; Pallas pads the
        # block with undefined data.  Replace (not multiply!) those rows so a
        # stray NaN/Inf can never leak into the matmuls below.
        row = jax.lax.broadcasted_iota(jnp.int32, (th, w), 0) + row_block * th
        valid = row < h4
        d_rows = jnp.where(valid, d_rows, 0.0)
        p_rows = jnp.where(valid, p_rows, 0.0)

    # Column part of the downsample: one MXU matmul against the 0.5-selection
    # matrix (picks columns 4j+1 and 4j+2 of every group of 4).
    smat = smat_ref[...]                                                  # (w, w4)
    d_dn = jnp.dot(d_rows, smat, preferred_element_type=jnp.float32)     # (th, w4)
    w_dn = jnp.dot(p_rows, smat, preferred_element_type=jnp.float32)     # (th, w4)
    w4 = d_dn.shape[1]

    g1 = w_dn * d_dn              # w * d
    g2 = g1 * d_dn                # w * d^2

    # Coordinate power matrices built from iota (nothing read from HBM):
    #   Pt[a, r] = i_r^a  with i_r the global 1/4-res row index of tile row r
    #   Q [c, b] = j_c^b
    iv = (jax.lax.broadcasted_iota(jnp.int32, (3, th), 1)
          + row_block * th).astype(jnp.float32)
    ea = jax.lax.broadcasted_iota(jnp.int32, (3, th), 0)
    pt = jnp.where(ea == 0, 1.0, jnp.where(ea == 1, iv, iv * iv))         # (3, th)

    jv = jax.lax.broadcasted_iota(jnp.int32, (w4, 3), 0).astype(jnp.float32)
    eb = jax.lax.broadcasted_iota(jnp.int32, (w4, 3), 1)
    q = jnp.where(eb == 0, 1.0, jnp.where(eb == 1, jv, jv * jv))          # (w4, 3)

    def raw_moments(g):
        gq = jnp.dot(g, q, preferred_element_type=jnp.float32)           # (th, 3)
        return jnp.dot(pt, gq, preferred_element_type=jnp.float32)       # (3, 3)

    m2_ref[...] += raw_moments(g2)
    m1_ref[...] += raw_moments(g1)
    m0_ref[...] += raw_moments(w_dn)


# ----------------------------------------------------------------------------
# Tiny closed-form 3x3 helpers (plain JAX, replace jnp.linalg.inv / pinv)
# ----------------------------------------------------------------------------
def _inv3x3(m):
    c00 = m[:, 1, 1] * m[:, 2, 2] - m[:, 1, 2] * m[:, 2, 1]
    c01 = m[:, 0, 2] * m[:, 2, 1] - m[:, 0, 1] * m[:, 2, 2]
    c02 = m[:, 0, 1] * m[:, 1, 2] - m[:, 0, 2] * m[:, 1, 1]
    c10 = m[:, 1, 2] * m[:, 2, 0] - m[:, 1, 0] * m[:, 2, 2]
    c11 = m[:, 0, 0] * m[:, 2, 2] - m[:, 0, 2] * m[:, 2, 0]
    c12 = m[:, 0, 2] * m[:, 1, 0] - m[:, 0, 0] * m[:, 1, 2]
    c20 = m[:, 1, 0] * m[:, 2, 1] - m[:, 1, 1] * m[:, 2, 0]
    c21 = m[:, 0, 1] * m[:, 2, 0] - m[:, 0, 0] * m[:, 2, 1]
    c22 = m[:, 0, 0] * m[:, 1, 1] - m[:, 0, 1] * m[:, 1, 0]
    det = m[:, 0, 0] * c00 + m[:, 0, 1] * c10 + m[:, 0, 2] * c20
    adj = jnp.stack([jnp.stack([c00, c01, c02], axis=-1),
                     jnp.stack([c10, c11, c12], axis=-1),
                     jnp.stack([c20, c21, c22], axis=-1)], axis=-2)
    return adj / det[:, None, None]


def _adjugate_sym3(a):
    a00, a01, a02 = a[:, 0, 0], a[:, 0, 1], a[:, 0, 2]
    a11, a12, a22 = a[:, 1, 1], a[:, 1, 2], a[:, 2, 2]
    c00 = a11 * a22 - a12 * a12
    c01 = a02 * a12 - a01 * a22
    c02 = a01 * a12 - a02 * a11
    c11 = a00 * a22 - a02 * a02
    c12 = a01 * a02 - a00 * a12
    c22 = a00 * a11 - a01 * a01
    adj = jnp.stack([jnp.stack([c00, c01, c02], axis=-1),
                     jnp.stack([c01, c11, c12], axis=-1),
                     jnp.stack([c02, c12, c22], axis=-1)], axis=-2)
    det = a00 * c00 + a01 * c01 + a02 * c02
    return adj, det


# ----------------------------------------------------------------------------
# Forward
# ----------------------------------------------------------------------------
def scale_recovery(plane_est, depth, intrinsics, h_gt=1.7):
    batch, ch, hh, ww = depth.shape
    assert ch == 1 and plane_est.shape == depth.shape
    assert hh % 4 == 0 and ww % 4 == 0, "H and W must be multiples of 4"
    h4, w4 = hh // 4, ww // 4

    # Free (bitcast) reshape: 1/4-res rows on sublanes, the 4 full-res
    # sub-rows of each merged into the lane axis.
    depth_r = depth.astype(jnp.float32).reshape(batch, 1, h4, 4 * ww)
    plane_r = plane_est.astype(jnp.float32).reshape(batch, 1, h4, 4 * ww)

    th, t_total, nsplit = _plan_tiles(h4, ww, batch)
    t_per_split = t_total // nsplit
    ragged = t_total * th > h4

    # 0.5-selection matrix for the column downsample (DMA'd to VMEM once).
    cc = jnp.arange(ww, dtype=jnp.int32)[:, None]
    cd = jnp.arange(w4, dtype=jnp.int32)[None, :]
    smat = jnp.where((cc == 4 * cd + 1) | (cc == 4 * cd + 2),
                     jnp.float32(0.5), jnp.float32(0.0))                  # (W, W4)

    kernel = functools.partial(_moments_kernel, th=th, w=ww, h4=h4,
                               t_per_split=t_per_split, ragged=ragged)
    mom_shape = jax.ShapeDtypeStruct((nsplit, batch, 3, 3), jnp.float32)
    mom_spec = pl.BlockSpec((None, None, 3, 3), lambda s, b, t: (s, b, 0, 0))
    img_spec = pl.BlockSpec((None, None, th, 4 * ww),
                            lambda s, b, t: (b, 0, s * t_per_split + t, 0))

    m2, m1, m0 = pl.pallas_call(
        kernel,
        out_shape=(mom_shape, mom_shape, mom_shape),
        grid_spec=pltpu.PrefetchScalarGridSpec(
            num_scalar_prefetch=0,
            grid=(nsplit, batch, t_per_split),
            in_specs=[
                pl.BlockSpec((ww, w4), lambda s, b, t: (0, 0)),
                img_spec,
                img_spec,
            ],
            out_specs=[mom_spec, mom_spec, mom_spec],
        ),
        compiler_params=pltpu.CompilerParams(
            dimension_semantics=("parallel", "parallel", "arbitrary")),
    )(smat, depth_r, plane_r)

    # Sum partial moments over the reduction split (tiny).
    m2, m1, m0 = m2.sum(axis=0), m1.sum(axis=0), m0.sum(axis=0)

    # Assemble  Mq = sum w d^2 q q^T  and  v = sum w d q  with q = [j, i, 1].
    mq = jnp.stack([
        jnp.stack([m2[:, 0, 2], m2[:, 1, 1], m2[:, 0, 1]], axis=-1),
        jnp.stack([m2[:, 1, 1], m2[:, 2, 0], m2[:, 1, 0]], axis=-1),
        jnp.stack([m2[:, 0, 1], m2[:, 1, 0], m2[:, 0, 0]], axis=-1)], axis=-2)
    v = jnp.stack([m1[:, 0, 1], m1[:, 1, 0], m1[:, 0, 0]], axis=-1)      # (B, 3)
    sum_w = m0[:, 0, 0]                                                  # (B,)

    # Quarter-resolution inverse intrinsics (closed form).
    row_scale = jnp.array([[0.25], [0.25], [1.0]], jnp.float32)
    kinv = _inv3x3(intrinsics.astype(jnp.float32) * row_scale[None])

    a_mat = jnp.einsum('bij,bjk,blk->bil', kinv, mq, kinv)   # sum w cam cam^T
    left = jnp.einsum('bij,bj->bi', kinv, v)                 # sum w cam

    # Symmetric 3x3 solve (replaces torch.pinverse): n ~ A^-1 left via the
    # adjugate with a tiny ridge; the normalisation absorbs the det factor.
    tr = a_mat[:, 0, 0] + a_mat[:, 1, 1] + a_mat[:, 2, 2]
    ridge = 1e-7 * tr / 3.0 + 1e-30
    a_r = a_mat + ridge[:, None, None] * jnp.eye(3, dtype=jnp.float32)
    adj, det = _adjugate_sym3(a_r)
    n_dir = jnp.einsum('bij,bj->bi', adj, left) * jnp.sign(det)[:, None]
    n = n_dir / jnp.linalg.norm(n_dir, axis=1, keepdims=True)

    # height = (sum_p w_p cam_p . n) / sum_p w_p
    height = jnp.sum(left * n, axis=1) / sum_w
    return h_gt / height


def plane_height_loss(plane_est, depth, intrinsics, camera_height):
    """Forward of Plane_Height_loss: returns (scale_factor, depth_loss)."""
    scale_factor = scale_recovery(plane_est, depth, intrinsics,
                                  h_gt=camera_height / 30.0)
    # |d*s - d| / (d*s) == |s - 1| / s for every pixel with d > 0, so the
    # full-resolution mean collapses to a per-batch closed form.
    # TODO(synk): pixels with depth == 0 yield NaN/Inf in the PyTorch
    # reference; the closed form includes them with the finite value instead.
    depth_loss = jnp.mean(jnp.abs(scale_factor - 1.0) / scale_factor)
    return scale_factor, depth_loss


# ----------------------------------------------------------------------------
# Plain-JAX transcription of the PyTorch module (pinv path) for self-checking.
# ----------------------------------------------------------------------------
def _reference(plane_est, depth, intrinsics, camera_height):
    b, _, hh, ww = depth.shape
    h4, w4 = hh // 4, ww // 4
    h_gt = camera_height / 30.0
    p3 = plane_est.astype(jnp.float32) ** 3

    def down(x):
        xr = x.reshape(b, 1, h4, 4, w4, 4)
        return xr[:, :, :, 1:3, :, 1:3].mean(axis=(3, 5))

    p_dn = down(p3).reshape(b, -1)
    d_dn = down(depth.astype(jnp.float32))
    k = intrinsics.astype(jnp.float32) * jnp.array([[0.25], [0.25], [1.0]],
                                                   jnp.float32)[None]
    kinv = jnp.linalg.inv(k)
    jj = jnp.tile(jnp.arange(w4, dtype=jnp.float32), h4)
    ii = jnp.repeat(jnp.arange(h4, dtype=jnp.float32), w4)
    pix = jnp.stack([jj, ii, jnp.ones_like(jj)], axis=0)
    cam = jnp.einsum('bij,jn->bin', kinv, pix) * d_dn.reshape(b, 1, -1)
    cam = jnp.transpose(cam, (0, 2, 1))
    left = jnp.einsum('bn,bnk->bk', p_dn, cam)
    a_mat = jnp.einsum('bn,bnj,bnk->bjk', p_dn, cam, cam)
    normal = jnp.einsum('bj,bjk->bk', left, jnp.linalg.pinv(a_mat))
    n = normal / jnp.linalg.norm(normal, axis=1, keepdims=True)
    heights = jnp.einsum('bnk,bk->bn', cam, n)
    height = jnp.sum(p_dn * heights, axis=1) / jnp.sum(p_dn, axis=1)
    scale = h_gt / height
    target = depth.astype(jnp.float32) * scale[:, None, None, None]
    loss = jnp.mean(jnp.abs(target - depth) / target)
    return scale, loss


if __name__ == "__main__":
    key = jax.random.PRNGKey(0)
    k1, k2, k3, k4 = jax.random.split(key, 4)

    camera_height = 51.0  # config['camera_height']; h_gt = 51 / 30 = 1.7
    fn = jax.jit(plane_height_loss)
    ref_fn = jax.jit(_reference)

    # Case 1: B=2, 64x64 (single row tile per batch element).
    b, hh, ww = 2, 64, 64
    plane_est = jax.random.uniform(k1, (b, 1, hh, ww), jnp.float32, 0.3, 0.9)
    depth = jax.random.uniform(k2, (b, 1, hh, ww), jnp.float32, 1.0, 5.0)
    intrinsics = jnp.array(
        [[[50.0, 0.0, 32.0], [0.0, 50.0, 32.0], [0.0, 0.0, 1.0]],
         [[55.0, 0.0, 31.0], [0.0, 55.0, 33.0], [0.0, 0.0, 1.0]]], jnp.float32)
    scale, loss = fn(plane_est, depth, intrinsics, camera_height)
    jax.block_until_ready((scale, loss))
    scale_ref, loss_ref = ref_fn(plane_est, depth, intrinsics, camera_height)
    assert jnp.allclose(scale, scale_ref, rtol=1e-2, atol=1e-3), (scale, scale_ref)
    assert jnp.allclose(loss, loss_ref, rtol=1e-2, atol=1e-3), (loss, loss_ref)

    # Case 2: B=1 with H/4=19 (ragged last row tile) to exercise the in-kernel
    # masking and the 2-way reduction split (second TensorCore on v7x).
    b2, h2, w2 = 1, 76, 64
    plane2 = jax.random.uniform(k3, (b2, 1, h2, w2), jnp.float32, 0.3, 0.9)
    depth2 = jax.random.uniform(k4, (b2, 1, h2, w2), jnp.float32, 1.0, 5.0)
    scale2, loss2 = fn(plane2, depth2, intrinsics[:1], camera_height)
    jax.block_until_ready((scale2, loss2))
    scale2_ref, loss2_ref = ref_fn(plane2, depth2, intrinsics[:1], camera_height)
    assert jnp.allclose(scale2, scale2_ref, rtol=1e-2, atol=1e-3), (scale2, scale2_ref)
    assert jnp.allclose(loss2, loss2_ref, rtol=1e-2, atol=1e-3), (loss2, loss2_ref)

    print("KERNEL_OK")
</pallas_src>

<mosaic_0001>
module attributes {stable_mosaic.version = 11 : i64} {
  func.func @_moments_kernel(%arg0: i32, %arg1: i32, %arg2: i32, %arg3: memref<64x16xf32, #tpu.memory_space<vmem>>, %arg4: memref<1x1x16x256xf32, #tpu.memory_space<vmem>>, %arg5: memref<1x1x16x256xf32, #tpu.memory_space<vmem>>, %arg6: memref<1x1x3x3xf32, #tpu.memory_space<vmem>>, %arg7: memref<1x1x3x3xf32, #tpu.memory_space<vmem>>, %arg8: memref<1x1x3x3xf32, #tpu.memory_space<vmem>>) attributes {dimension_semantics = [#tpu.dimension_semantics<parallel>, #tpu.dimension_semantics<parallel>, #tpu.dimension_semantics<arbitrary>], iteration_bounds = array<i64: 1, 2, 1>, scalar_prefetch = 0 : i64, scratch_operands = 0 : i64, tpu.core_type = #tpu.core_type<tc>, window_params = [{pipeline_mode = #tpu.pipeline_mode<synchronous>, transform_indices = @transform_0, window_bounds = array<i64: 64, 16>}, {transform_indices = @transform_1, window_bounds = array<i64: 1, 1, 16, 256>}, {transform_indices = @transform_2, window_bounds = array<i64: 1, 1, 16, 256>}, {transform_indices = @transform_3, window_bounds = array<i64: 1, 1, 3, 3>}, {transform_indices = @transform_4, window_bounds = array<i64: 1, 1, 3, 3>}, {transform_indices = @transform_5, window_bounds = array<i64: 1, 1, 3, 3>}]} {
    %c1_i32 = arith.constant 1 : i32
    %0 = arith.muli %arg0, %c1_i32 : i32
    %1 = arith.addi %0, %arg2 : i32
    %c0_i32 = arith.constant 0 : i32
    %2 = arith.cmpi eq, %arg2, %c0_i32 : i32
    %3 = arith.extui %2 : i1 to i32
    %c0_i32_0 = arith.constant 0 : i32
    %4 = arith.cmpi ne, %3, %c0_i32_0 : i32
    scf.if %4 {
      %cst_55 = arith.constant 0.000000e+00 : f32
      %77 = vector.broadcast %cst_55 : f32 to vector<3x3xf32>
      %c0_56 = arith.constant 0 : index
      %c0_57 = arith.constant 0 : index
      %c0_58 = arith.constant 0 : index
      %c0_59 = arith.constant 0 : index
      %78 = vector.load %arg6[%c0_56, %c0_57, %c0_58, %c0_59] : memref<1x1x3x3xf32, #tpu.memory_space<vmem>>, vector<1x1x3x3xf32>
      %79 = vector.shape_cast %78 : vector<1x1x3x3xf32> to vector<3x3xf32>
      %80 = vector.shape_cast %77 : vector<3x3xf32> to vector<1x1x3x3xf32>
      tpu.vector_store %arg6[%c0_56, %c0_57, %c0_58, %c0_59], %80 {strides = array<i32>} : memref<1x1x3x3xf32, #tpu.memory_space<vmem>>, vector<1x1x3x3xf32>,
      %cst_60 = arith.constant 0.000000e+00 : f32
      %81 = vector.broadcast %cst_60 : f32 to vector<3x3xf32>
      %c0_61 = arith.constant 0 : index
      %c0_62 = arith.constant 0 : index
      %c0_63 = arith.constant 0 : index
      %c0_64 = arith.constant 0 : index
      %82 = vector.load %arg7[%c0_61, %c0_62, %c0_63, %c0_64] : memref<1x1x3x3xf32, #tpu.memory_space<vmem>>, vector<1x1x3x3xf32>
      %83 = vector.shape_cast %82 : vector<1x1x3x3xf32> to vector<3x3xf32>
      %84 = vector.shape_cast %81 : vector<3x3xf32> to vector<1x1x3x3xf32>
      tpu.vector_store %arg7[%c0_61, %c0_62, %c0_63, %c0_64], %84 {strides = array<i32>} : memref<1x1x3x3xf32, #tpu.memory_space<vmem>>, vector<1x1x3x3xf32>,
      %cst_65 = arith.constant 0.000000e+00 : f32
      %85 = vector.broadcast %cst_65 : f32 to vector<3x3xf32>
      %c0_66 = arith.constant 0 : index
      %c0_67 = arith.constant 0 : index
      %c0_68 = arith.constant 0 : index
      %c0_69 = arith.constant 0 : index
      %86 = vector.load %arg8[%c0_66, %c0_67, %c0_68, %c0_69] : memref<1x1x3x3xf32, #tpu.memory_space<vmem>>, vector<1x1x3x3xf32>
      %87 = vector.shape_cast %86 : vector<1x1x3x3xf32> to vector<3x3xf32>
      %88 = vector.shape_cast %85 : vector<3x3xf32> to vector<1x1x3x3xf32>
      tpu.vector_store %arg8[%c0_66, %c0_67, %c0_68, %c0_69], %88 {strides = array<i32>} : memref<1x1x3x3xf32, #tpu.memory_space<vmem>>, vector<1x1x3x3xf32>,
    } else {
    }
    %c0 = arith.constant 0 : index
    %c0_1 = arith.constant 0 : index
    %c0_2 = arith.constant 0 : index
    %c64 = arith.constant 64 : index
    %5 = vector.load %arg4[%c0, %c0_1, %c0_2, %c64] : memref<1x1x16x256xf32, #tpu.memory_space<vmem>>, vector<1x1x16x64xf32>
    %6 = vector.shape_cast %5 : vector<1x1x16x64xf32> to vector<16x64xf32>
    %c0_3 = arith.constant 0 : index
    %c0_4 = arith.constant 0 : index
    %c0_5 = arith.constant 0 : index
    %c128 = arith.constant 128 : index
    %7 = vector.load %arg4[%c0_3, %c0_4, %c0_5, %c128] : memref<1x1x16x256xf32, #tpu.memory_space<vmem>>, vector<1x1x16x64xf32>
    %8 = vector.shape_cast %7 : vector<1x1x16x64xf32> to vector<16x64xf32>
    %9 = arith.addf %6, %8 : vector<16x64xf32>
    %cst = arith.constant 5.000000e-01 : f32
    %10 = vector.broadcast %cst : f32 to vector<16x64xf32>
    %11 = arith.mulf %10, %9 : vector<16x64xf32>
    %c0_6 = arith.constant 0 : index
    %c0_7 = arith.constant 0 : index
    %c0_8 = arith.constant 0 : index
    %c64_9 = arith.constant 64 : index
    %12 = vector.load %arg5[%c0_6, %c0_7, %c0_8, %c64_9] : memref<1x1x16x256xf32, #tpu.memory_space<vmem>>, vector<1x1x16x64xf32>
    %13 = vector.shape_cast %12 : vector<1x1x16x64xf32> to vector<16x64xf32>
    %c0_10 = arith.constant 0 : index
    %c0_11 = arith.constant 0 : index
    %c0_12 = arith.constant 0 : index
    %c128_13 = arith.constant 128 : index
    %14 = vector.load %arg5[%c0_10, %c0_11, %c0_12, %c128_13] : memref<1x1x16x256xf32, #tpu.memory_space<vmem>>, vector<1x1x16x64xf32>
    %15 = vector.shape_cast %14 : vector<1x1x16x64xf32> to vector<16x64xf32>
    %16 = arith.mulf %13, %13 : vector<16x64xf32>
    %17 = arith.mulf %16, %13 : vector<16x64xf32>
    %18 = arith.mulf %15, %15 : vector<16x64xf32>
    %19 = arith.mulf %18, %15 : vector<16x64xf32>
    %20 = arith.addf %17, %19 : vector<16x64xf32>
    %cst_14 = arith.constant 5.000000e-01 : f32
    %21 = vector.broadcast %cst_14 : f32 to vector<16x64xf32>
    %22 = arith.mulf %21, %20 : vector<16x64xf32>
    %c0_15 = arith.constant 0 : index
    %c0_16 = arith.constant 0 : index
    %23 = vector.load %arg3[%c0_15, %c0_16] : memref<64x16xf32, #tpu.memory_space<vmem>>, vector<64x16xf32>
    %cst_17 = arith.constant dense<0.000000e+00> : vector<16x16xf32>
    %24 = tpu.matmul %11, %23, %cst_17 {dimension_numbers = #tpu.dot_dimension_numbers<[1], [0], [0], [1], [0, 0, 1, 1], [], []>} : vector<16x64xf32>, vector<64x16xf32>, vector<16x16xf32> -> vector<16x16xf32>
    %cst_18 = arith.constant dense<0.000000e+00> : vector<16x16xf32>
    %25 = tpu.matmul %22, %23, %cst_18 {dimension_numbers = #tpu.dot_dimension_numbers<[1], [0], [0], [1], [0, 0, 1, 1], [], []>} : vector<16x64xf32>, vector<64x16xf32>, vector<16x16xf32> -> vector<16x16xf32>
    %26 = arith.mulf %25, %24 : vector<16x16xf32>
    %27 = arith.mulf %26, %24 : vector<16x16xf32>
    %28 = tpu.iota {dimensions = array<i32: 1>} : vector<3x16xi32>
    %c16_i32 = arith.constant 16 : i32
    %29 = arith.muli %1, %c16_i32 : i32
    %30 = vector.broadcast %29 : i32 to vector<3x16xi32>
    %31 = arith.addi %28, %30 : vector<3x16xi32>
    %32 = arith.sitofp %31 : vector<3x16xi32> to vector<3x16xf32>
    %33 = tpu.iota {dimensions = array<i32: 0>} : vector<3x16xi32>
    %c0_i32_19 = arith.constant 0 : i32
    %34 = vector.broadcast %c0_i32_19 : i32 to vector<3x16xi32>
    %35 = arith.cmpi eq, %33, %34 : vector<3x16xi32>
    %c1_i32_20 = arith.constant 1 : i32
    %36 = vector.broadcast %c1_i32_20 : i32 to vector<3x16xi32>
    %37 = arith.cmpi eq, %33, %36 : vector<3x16xi32>
    %38 = arith.mulf %32, %32 : vector<3x16xf32>
    %39 = arith.select %37, %32, %38 : vector<3x16xi1>, vector<3x16xf32>
    %cst_21 = arith.constant 1.000000e+00 : f32
    %40 = vector.broadcast %cst_21 : f32 to vector<3x16xf32>
    %41 = arith.select %35, %40, %39 : vector<3x16xi1>, vector<3x16xf32>
    %42 = tpu.iota {dimensions = array<i32: 0>} : vector<16x3xi32>
    %43 = arith.sitofp %42 : vector<16x3xi32> to vector<16x3xf32>
    %44 = tpu.iota {dimensions = array<i32: 1>} : vector<16x3xi32>
    %c0_i32_22 = arith.constant 0 : i32
    %45 = vector.broadcast %c0_i32_22 : i32 to vector<16x3xi32>
    %46 = arith.cmpi eq, %44, %45 : vector<16x3xi32>
    %c1_i32_23 = arith.constant 1 : i32
    %47 = vector.broadcast %c1_i32_23 : i32 to vector<16x3xi32>
    %48 = arith.cmpi eq, %44, %47 : vector<16x3xi32>
    %49 = arith.mulf %43, %43 : vector<16x3xf32>
    %50 = arith.select %48, %43, %49 : vector<16x3xi1>, vector<16x3xf32>
    %cst_24 = arith.constant 1.000000e+00 : f32
    %51 = vector.broadcast %cst_24 : f32 to vector<16x3xf32>
    %52 = arith.select %46, %51, %50 : vector<16x3xi1>, vector<16x3xf32>
    %c0_25 = arith.constant 0 : index
    %c0_26 = arith.constant 0 : index
    %c0_27 = arith.constant 0 : index
    %c0_28 = arith.constant 0 : index
    %53 = vector.load %arg6[%c0_25, %c0_26, %c0_27, %c0_28] : memref<1x1x3x3xf32, #tpu.memory_space<vmem>>, vector<1x1x3x3xf32>
    %54 = vector.shape_cast %53 : vector<1x1x3x3xf32> to vector<3x3xf32>
    %cst_29 = arith.constant dense<0.000000e+00> : vector<16x3xf32>
    %55 = tpu.matmul %27, %52, %cst_29 {dimension_numbers = #tpu.dot_dimension_numbers<[1], [0], [0], [1], [0, 0, 1, 1], [], []>} : vector<16x16xf32>, vector<16x3xf32>, vector<16x3xf32> -> vector<16x3xf32>
    %cst_30 = arith.constant dense<0.000000e+00> : vector<3x3xf32>
    %56 = tpu.matmul %41, %55, %cst_30 {dimension_numbers = #tpu.dot_dimension_numbers<[1], [0], [0], [1], [0, 0, 1, 1], [], []>} : vector<3x16xf32>, vector<16x3xf32>, vector<3x3xf32> -> vector<3x3xf32>
    %57 = arith.addf %54, %56 : vector<3x3xf32>
    %c0_31 = arith.constant 0 : index
    %c0_32 = arith.constant 0 : index
    %c0_33 = arith.constant 0 : index
    %c0_34 = arith.constant 0 : index
    %58 = vector.load %arg6[%c0_31, %c0_32, %c0_33, %c0_34] : memref<1x1x3x3xf32, #tpu.memory_space<vmem>>, vector<1x1x3x3xf32>
    %59 = vector.shape_cast %58 : vector<1x1x3x3xf32> to vector<3x3xf32>
    %60 = vector.shape_cast %57 : vector<3x3xf32> to vector<1x1x3x3xf32>
    tpu.vector_store %arg6[%c0_31, %c0_32, %c0_33, %c0_34], %60 {strides = array<i32>} : memref<1x1x3x3xf32, #tpu.memory_space<vmem>>, vector<1x1x3x3xf32>,
    %c0_35 = arith.constant 0 : index
    %c0_36 = arith.constant 0 : index
    %c0_37 = arith.constant 0 : index
    %c0_38 = arith.constant 0 : index
    %61 = vector.load %arg7[%c0_35, %c0_36, %c0_37, %c0_38] : memref<1x1x3x3xf32, #tpu.memory_space<vmem>>, vector<1x1x3x3xf32>
    %62 = vector.shape_cast %61 : vector<1x1x3x3xf32> to vector<3x3xf32>
    %cst_39 = arith.constant dense<0.000000e+00> : vector<16x3xf32>
    %63 = tpu.matmul %26, %52, %cst_39 {dimension_numbers = #tpu.dot_dimension_numbers<[1], [0], [0], [1], [0, 0, 1, 1], [], []>} : vector<16x16xf32>, vector<16x3xf32>, vector<16x3xf32> -> vector<16x3xf32>
    %cst_40 = arith.constant dense<0.000000e+00> : vector<3x3xf32>
    %64 = tpu.matmul %41, %63, %cst_40 {dimension_numbers = #tpu.dot_dimension_numbers<[1], [0], [0], [1], [0, 0, 1, 1], [], []>} : vector<3x16xf32>, vector<16x3xf32>, vector<3x3xf32> -> vector<3x3xf32>
    %65 = arith.addf %62, %64 : vector<3x3xf32>
    %c0_41 = arith.constant 0 : index
    %c0_42 = arith.constant 0 : index
    %c0_43 = arith.constant 0 : index
    %c0_44 = arith.constant 0 : index
    %66 = vector.load %arg7[%c0_41, %c0_42, %c0_43, %c0_44] : memref<1x1x3x3xf32, #tpu.memory_space<vmem>>, vector<1x1x3x3xf32>
    %67 = vector.shape_cast %66 : vector<1x1x3x3xf32> to vector<3x3xf32>
    %68 = vector.shape_cast %65 : vector<3x3xf32> to vector<1x1x3x3xf32>
    tpu.vector_store %arg7[%c0_41, %c0_42, %c0_43, %c0_44], %68 {strides = array<i32>} : memref<1x1x3x3xf32, #tpu.memory_space<vmem>>, vector<1x1x3x3xf32>,
    %c0_45 = arith.constant 0 : index
    %c0_46 = arith.constant 0 : index
    %c0_47 = arith.constant 0 : index
    %c0_48 = arith.constant 0 : index
    %69 = vector.load %arg8[%c0_45, %c0_46, %c0_47, %c0_48] : memref<1x1x3x3xf32, #tpu.memory_space<vmem>>, vector<1x1x3x3xf32>
    %70 = vector.shape_cast %69 : vector<1x1x3x3xf32> to vector<3x3xf32>
    %cst_49 = arith.constant dense<0.000000e+00> : vector<16x3xf32>
    %71 = tpu.matmul %25, %52, %cst_49 {dimension_numbers = #tpu.dot_dimension_numbers<[1], [0], [0], [1], [0, 0, 1, 1], [], []>} : vector<16x16xf32>, vector<16x3xf32>, vector<16x3xf32> -> vector<16x3xf32>
    %cst_50 = arith.constant dense<0.000000e+00> : vector<3x3xf32>
    %72 = tpu.matmul %41, %71, %cst_50 {dimension_numbers = #tpu.dot_dimension_numbers<[1], [0], [0], [1], [0, 0, 1, 1], [], []>} : vector<3x16xf32>, vector<16x3xf32>, vector<3x3xf32> -> vector<3x3xf32>
    %73 = arith.addf %70, %72 : vector<3x3xf32>
    %c0_51 = arith.constant 0 : index
    %c0_52 = arith.constant 0 : index
    %c0_53 = arith.constant 0 : index
    %c0_54 = arith.constant 0 : index
    %74 = vector.load %arg8[%c0_51, %c0_52, %c0_53, %c0_54] : memref<1x1x3x3xf32, #tpu.memory_space<vmem>>, vector<1x1x3x3xf32>
    %75 = vector.shape_cast %74 : vector<1x1x3x3xf32> to vector<3x3xf32>
    %76 = vector.shape_cast %73 : vector<3x3xf32> to vector<1x1x3x3xf32>
    tpu.vector_store %arg8[%c0_51, %c0_52, %c0_53, %c0_54], %76 {strides = array<i32>} : memref<1x1x3x3xf32, #tpu.memory_space<vmem>>, vector<1x1x3x3xf32>,
    return
  }
  func.func @transform_0(%arg0: i32, %arg1: i32, %arg2: i32) -> (i32, i32) {
    %c0_i32 = arith.constant 0 : i32
    %c0_i32_0 = arith.constant 0 : i32
    %c0_i32_1 = arith.constant 0 : i32
    return %c0_i32, %c0_i32_0 : i32, i32
  }
  func.func @transform_1(%arg0: i32, %arg1: i32, %arg2: i32) -> (i32, i32, i32, i32) {
    %c1_i32 = arith.constant 1 : i32
    %0 = arith.muli %arg0, %c1_i32 : i32
    %1 = arith.addi %0, %arg2 : i32
    %c0_i32 = arith.constant 0 : i32
    %c0_i32_0 = arith.constant 0 : i32
    %c0_i32_1 = arith.constant 0 : i32
    return %arg1, %c0_i32, %1, %c0_i32_0 : i32, i32, i32, i32
  }
  func.func @transform_2(%arg0: i32, %arg1: i32, %arg2: i32) -> (i32, i32, i32, i32) {
    %c1_i32 = arith.constant 1 : i32
    %0 = arith.muli %arg0, %c1_i32 : i32
    %1 = arith.addi %0, %arg2 : i32
    %c0_i32 = arith.constant 0 : i32
    %c0_i32_0 = arith.constant 0 : i32
    %c0_i32_1 = arith.constant 0 : i32
    return %arg1, %c0_i32, %1, %c0_i32_0 : i32, i32, i32, i32
  }
  func.func @transform_3(%arg0: i32, %arg1: i32, %arg2: i32) -> (i32, i32, i32, i32) {
    %c0_i32 = arith.constant 0 : i32
    %c0_i32_0 = arith.constant 0 : i32
    %c0_i32_1 = arith.constant 0 : i32
    return %arg0, %arg1, %c0_i32, %c0_i32_0 : i32, i32, i32, i32
  }
  func.func @transform_4(%arg0: i32, %arg1: i32, %arg2: i32) -> (i32, i32, i32, i32) {
    %c0_i32 = arith.constant 0 : i32
    %c0_i32_0 = arith.constant 0 : i32
    %c0_i32_1 = arith.constant 0 : i32
    return %arg0, %arg1, %c0_i32, %c0_i32_0 : i32, i32, i32, i32
  }
  func.func @transform_5(%arg0: i32, %arg1: i32, %arg2: i32) -> (i32, i32, i32, i32) {
    %c0_i32 = arith.constant 0 : i32
    %c0_i32_0 = arith.constant 0 : i32
    %c0_i32_1 = arith.constant 0 : i32
    return %arg0, %arg1, %c0_i32, %c0_i32_0 : i32, i32, i32, i32
  }
}

</mosaic_0001>

<llo_original>
// kernel: plane_height_loss.1
$region0: #{plane_height_loss.1}
  #allocation0 [shape = 'u32[]', space=smem, size = 0x4, offset = 0x4, fixed_abs, tag = 'smem constant byte address 0x4 - core index']
  #allocation1 [shape = 'u32[144,128]{1,0:T(1,128)}', space=vmem, size = 0x12000, scoped, tag = 'internal scratch']
  %s0 = inlined_call_operand.vmem [shape: f32[64,16], index: 0, kind: input, shape index: {}]
  %s1 = inlined_call_operand.vmem [shape: f32[2,1,16,256], index: 1, kind: input, shape index: {}]
  %s2 = inlined_call_operand.vmem [shape: f32[2,1,16,256], index: 2, kind: input, shape index: {}]
  %s3 = inlined_call_operand.vmem [shape: f32[1,2,3,3], index: 3, kind: output, shape index: {0}]
  %s4 = inlined_call_operand.vmem [shape: f32[1,2,3,3], index: 4, kind: output, shape index: {1}]
  %s5 = inlined_call_operand.vmem [shape: f32[1,2,3,3], index: 5, kind: output, shape index: {2}]
  %6 = xla_tuple %s3, %s4, %s5
  %s7 = sld [smem:[#allocation0]]
  $region65: #{plane_height_loss.1} parent=0
    _
  %s9 = ssub.s32 1, %s7
  %s10 = scalar_select 0, %s9, %s7
  loop: start=0, step=1, limit=4
  $region2: #{plane_height_loss.1} parent=0 // loop_pre_header
    _
  $region3: #{plane_height_loss.1} parent=0 // loop_header
    %s12 = sphi 0, %s16
    %p13 = scmp.ge.s32.totalorder %s12, 4
    %s19 = sphi 0, %s38
    %s20 = sphi 0, %s34
    %s21 = sphi 0, %s30
    %s22 = sphi 0, %s19
    %s23 = sphi 0, %s20
    %s24 = sphi 0, %s21
    %s25 = sphi 0, %s22
    %s26 = sphi 0, %s23
    %s27 = sphi 0, %s24
    %s39 = sphi 0, %s39
    %s41 = sphi 0, %s39
    %s42 = sphi 0, %s41
    %s56 = sphi 0, %s42
    %s66 = sphi 0, %s68
    %s69 = sphi 0, %s66
    %s70 = sphi 0, %s69
    %s86 = sphi 0, %s70
    %s96 = sphi 0, %s98
    %s99 = sphi 0, %s96
    %s100 = sphi 0, %s99
    %s116 = sphi 0, %s100
    %s124 = sphi 0, %s126
    %s127 = sphi 0, %s124
    %s128 = sphi 0, %s127
    %s144 = sphi 0, %s128
    %s152 = sphi 0, %s154
    %s155 = sphi 0, %s152
    %s156 = sphi 0, %s155
    %s172 = sphi 0, %s156
    %s180 = sphi 0, %s182
    %s183 = sphi 0, %s180
    %s184 = sphi 0, %s183
    %s200 = sphi 0, %s184
  $region4: #{plane_height_loss.1} parent=0 // loop_header_branch
    %15 = sbr.rel (%p13) target = $region8
  $region5: #{plane_height_loss.1} parent=0 // loop_body
    %s17 = ssub.s32 %s12, 1
    %s18 = ssub.s32 %s12, 2
    %s28 = sadd.s32 1, %s21
    %p29 = scmp.ge.s32.totalorder %s28, 1
    %s30 = scalar_select %p29, 0, %s28
    %s31 = sadd.s32 1, %s20
    %s32 = scalar_select %p29, %s31, %s20
    %p33 = scmp.ge.s32.totalorder %s32, 2
    %s34 = scalar_select %p33, 0, %s32
    %s35 = sadd.s32 1, %s19
    %s36 = scalar_select %p33, %s35, %s19
    %p37 = scmp.ge.s32.totalorder %s36, 1
    %s38 = scalar_select %p37, 0, %s36
    %s40 = sadd.s32 %s39, 1
    %p43 = scmp.eq.s32.totalorder %s12, 1
    %p44 = scmp.ne.s32.totalorder %s39, %s41
    %p45 = scmp.eq.s32.totalorder %s12, 0
    %p46 = por %p44, %p45
    %p47 = scmp.ne.s32.totalorder %s39, %s41
    %p48 = scmp.eq.s32.totalorder %s17, 1
    %p49 = por %p47, %p48
    %p50 = scmp.ne.s32.totalorder %s41, %s42
    %p51 = scmp.eq.s32.totalorder %s17, 0
    %p52 = por %p50, %p51
    %p53 = scmp.ne.s32.totalorder %s41, %s42
    %p54 = scmp.eq.s32.totalorder %s18, 1
    %p55 = por %p53, %p54
    %p57 = scmp.ne.s32.totalorder %s42, %s56
    %p58 = scmp.eq.s32.totalorder %s18, 0
    %p59 = por %p57, %p58
    %s60 = sadd.s32 %s19, %s21
    %s61 = sadd.s32 %s38, %s30
    %s62 = ssub.s32 %s20, %s34
    %s63 = ssub.s32 %s60, %s61
    %s64 = sor.u32 %s62, %s63
    %p65 = scmp.eq.s32.totalorder %s64, 0
    %s67 = sadd.s32 %s66, 1
    %s68 = scalar_select %p65, %s66, %s67
    %p71 = pneg %p65
    %p72 = scmp.eq.s32.totalorder %s12, 1
    %p73 = por %p71, %p72
    %p74 = scmp.ne.s32.totalorder %s66, %s69
    %p75 = scmp.eq.s32.totalorder %s12, 0
    %p76 = por %p74, %p75
    %p77 = scmp.ne.s32.totalorder %s66, %s69
    %p78 = scmp.eq.s32.totalorder %s17, 1
    %p79 = por %p77, %p78
    %p80 = scmp.ne.s32.totalorder %s69, %s70
    %p81 = scmp.eq.s32.totalorder %s17, 0
    %p82 = por %p80, %p81
    %p83 = scmp.ne.s32.totalorder %s69, %s70
    %p84 = scmp.eq.s32.totalorder %s18, 1
    %p85 = por %p83, %p84
    %p87 = scmp.ne.s32.totalorder %s70, %s86
    %p88 = scmp.eq.s32.totalorder %s18, 0
    %p89 = por %p87, %p88
    %s90 = sadd.s32 %s19, %s21
    %s91 = sadd.s32 %s38, %s30
    %s92 = ssub.s32 %s20, %s34
    %s93 = ssub.s32 %s90, %s91
    %s94 = sor.u32 %s92, %s93
    %p95 = scmp.eq.s32.totalorder %s94, 0
    %s97 = sadd.s32 %s96, 1
    %s98 = scalar_select %p95, %s96, %s97
    %p101 = pneg %p95
    %p102 = scmp.eq.s32.totalorder %s12, 1
    %p103 = por %p101, %p102
    %p104 = scmp.ne.s32.totalorder %s96, %s99
    %p105 = scmp.eq.s32.totalorder %s12, 0
    %p106 = por %p104, %p105
    %p107 = scmp.ne.s32.totalorder %s96, %s99
    %p108 = scmp.eq.s32.totalorder %s17, 1
    %p109 = por %p107, %p108
    %p110 = scmp.ne.s32.totalorder %s99, %s100
    %p111 = scmp.eq.s32.totalorder %s17, 0
    %p112 = por %p110, %p111
    %p113 = scmp.ne.s32.totalorder %s99, %s100
    %p114 = scmp.eq.s32.totalorder %s18, 1
    %p115 = por %p113, %p114
    %p117 = scmp.ne.s32.totalorder %s100, %s116
    %p118 = scmp.eq.s32.totalorder %s18, 0
    %p119 = por %p117, %p118
    %s120 = ssub.s32 %s19, %s38
    %s121 = ssub.s32 %s20, %s34
    %s122 = sor.u32 %s120, %s121
    %p123 = scmp.eq.s32.totalorder %s122, 0
    %s125 = sadd.s32 %s124, 1
    %s126 = scalar_select %p123, %s124, %s125
    %p129 = pneg %p123
    %p130 = scmp.eq.s32.totalorder %s12, 1
    %p131 = por %p129, %p130
    %p132 = scmp.ne.s32.totalorder %s124, %s127
    %p133 = scmp.eq.s32.totalorder %s12, 0
    %p134 = por %p132, %p133
    %p135 = scmp.ne.s32.totalorder %s124, %s127
    %p136 = scmp.eq.s32.totalorder %s17, 1
    %p137 = por %p135, %p136
    %p138 = scmp.ne.s32.totalorder %s127, %s128
    %p139 = scmp.eq.s32.totalorder %s17, 0
    %p140 = por %p138, %p139
    %p141 = scmp.ne.s32.totalorder %s127, %s128
    %p142 = scmp.eq.s32.totalorder %s18, 1
    %p143 = por %p141, %p142
    %p145 = scmp.ne.s32.totalorder %s128, %s144
    %p146 = scmp.eq.s32.totalorder %s18, 0
    %p147 = por %p145, %p146
    %s148 = ssub.s32 %s19, %s38
    %s149 = ssub.s32 %s20, %s34
    %s150 = sor.u32 %s148, %s149
    %p151 = scmp.eq.s32.totalorder %s150, 0
    %s153 = sadd.s32 %s152, 1
    %s154 = scalar_select %p151, %s152, %s153
    %p157 = pneg %p151
    %p158 = scmp.eq.s32.totalorder %s12, 1
    %p159 = por %p157, %p158
    %p160 = scmp.ne.s32.totalorder %s152, %s155
    %p161 = scmp.eq.s32.totalorder %s12, 0
    %p162 = por %p160, %p161
    %p163 = scmp.ne.s32.totalorder %s152, %s155
    %p164 = scmp.eq.s32.totalorder %s17, 1
    %p165 = por %p163, %p164
    %p166 = scmp.ne.s32.totalorder %s155, %s156
    %p167 = scmp.eq.s32.totalorder %s17, 0
    %p168 = por %p166, %p167
    %p169 = scmp.ne.s32.totalorder %s155, %s156
    %p170 = scmp.eq.s32.totalorder %s18, 1
    %p171 = por %p169, %p170
    %p173 = scmp.ne.s32.totalorder %s156, %s172
    %p174 = scmp.eq.s32.totalorder %s18, 0
    %p175 = por %p173, %p174
    %s176 = ssub.s32 %s19, %s38
    %s177 = ssub.s32 %s20, %s34
    %s178 = sor.u32 %s176, %s177
    %p179 = scmp.eq.s32.totalorder %s178, 0
    %s181 = sadd.s32 %s180, 1
    %s182 = scalar_select %p179, %s180, %s181
    %p185 = pneg %p179
    %p186 = scmp.eq.s32.totalorder %s12, 1
    %p187 = por %p185, %p186
    %p188 = scmp.ne.s32.totalorder %s180, %s183
    %p189 = scmp.eq.s32.totalorder %s12, 0
    %p190 = por %p188, %p189
    %p191 = scmp.ne.s32.totalorder %s180, %s183
    %p192 = scmp.eq.s32.totalorder %s17, 1
    %p193 = por %p191, %p192
    %p194 = scmp.ne.s32.totalorder %s183, %s184
    %p195 = scmp.eq.s32.totalorder %s17, 0
    %p196 = por %p194, %p195
    %p197 = scmp.ne.s32.totalorder %s183, %s184
    %p198 = scmp.eq.s32.totalorder %s18, 1
    %p199 = por %p197, %p198
    %p201 = scmp.ne.s32.totalorder %s184, %s200
    %p202 = scmp.eq.s32.totalorder %s18, 0
    %p203 = por %p201, %p202
    %p204 = scmp.le.s32.totalorder 1, %s12
    %p205 = scmp.lt.s32.totalorder %s12, 3
    %p206 = pnand %p204, %p205
    %p207 = pneg %p206
    // Predicated region
    $region9: #{plane_height_loss.1} parent=5 // pred_check
      _
    $region10: #{plane_height_loss.1} parent=5 // pred_check_branch
      %209 = sbr.rel (%p206) target = $region12
    $region11: #{plane_height_loss.1} parent=5 // pred_region
      %s210 = ssub.s32 %s12, 1
      // Predicated region
      $region13: #{plane_height_loss.1} parent=11 // pred_check
        %p211 = pneg %p52
      $region14: #{plane_height_loss.1} parent=11 // pred_check_branch
        %213 = sbr.rel (%p211) target = $region16
      $region15: #{plane_height_loss.1} parent=11 // pred_region
        _
      $region16: #{plane_height_loss.1} parent=11 // pred_fallthru
        _
    $region12: #{plane_height_loss.1} parent=5 // pred_fallthru
      _
    %p214 = scmp.lt.s32.totalorder %s12, 2
    // Predicated region
    $region17: #{plane_height_loss.1} parent=5 // pred_check
      %p215 = pneg %p214
    $region18: #{plane_height_loss.1} parent=5 // pred_check_branch
      %217 = sbr.rel (%p215) target = $region20
    $region19: #{plane_height_loss.1} parent=5 // pred_region
      // Predicated region
      $region21: #{plane_height_loss.1} parent=19 // pred_check
        %p218 = pneg %p76
      $region22: #{plane_height_loss.1} parent=19 // pred_check_branch
        %220 = sbr.rel (%p218) target = $region24
      $region23: #{plane_height_loss.1} parent=19 // pred_region
        %s221 = sadd.s32 %s19, %s21
        %s222 = smul.u32 2, %s221
        %p223 = scmp.lt.s32.totalorder %s20, 1
        %s224 = scalar_select %p223, %s20, 1
        %p225 = scmp.lt.s32.totalorder %s222, 1
        %s226 = scalar_select %p225, %s222, 1
        %s227 = smul.addr %s226, 2
        %s228 = smul.addr %s224, 4
        %s229 = sadd.s32 %s227, %s228
        %s230 = smul.addr %s229, 8
        %s231 = scalar_lea.vmem %s1, %s230
        %s232 = sadd.s32 %s19, %s21
        %s233 = smul.u32 2, %s232
      $region24: #{plane_height_loss.1} parent=19 // pred_fallthru
        _
      // Predicated region
      $region25: #{plane_height_loss.1} parent=19 // pred_check
        %p234 = pneg %p106
      $region26: #{plane_height_loss.1} parent=19 // pred_check_branch
        %236 = sbr.rel (%p234) target = $region28
      $region27: #{plane_height_loss.1} parent=19 // pred_region
        %s237 = sadd.s32 %s19, %s21
        %s238 = smul.u32 2, %s237
        %p239 = scmp.lt.s32.totalorder %s20, 1
        %s240 = scalar_select %p239, %s20, 1
        %p241 = scmp.lt.s32.totalorder %s238, 1
        %s242 = scalar_select %p241, %s238, 1
        %s243 = smul.addr %s242, 2
        %s244 = smul.addr %s240, 4
        %s245 = sadd.s32 %s243, %s244
        %s246 = smul.addr %s245, 8
        %s247 = scalar_lea.vmem %s2, %s246
        %s248 = sadd.s32 %s19, %s21
        %s249 = smul.u32 2, %s248
      $region28: #{plane_height_loss.1} parent=19 // pred_fallthru
        _
    $region20: #{plane_height_loss.1} parent=5 // pred_fallthru
      _
    %p250 = scmp.le.s32.totalorder 1, %s12
    %p251 = scmp.lt.s32.totalorder %s12, 3
    %p252 = pnand %p250, %p251
    %p253 = pneg %p252
    // Predicated region
    $region29: #{plane_height_loss.1} parent=5 // pred_check
      _
    $region30: #{plane_height_loss.1} parent=5 // pred_check_branch
      %255 = sbr.rel (%p252) target = $region32
    $region31: #{plane_height_loss.1} parent=5 // pred_region
      %s256 = ssub.s32 %s12, 1
      %p257 = pneg %p52
      %p258 = pneg %p49
      %s259 = sadd.s32 %s22, %s24
      %s260 = smul.u32 2, %s259
      %p261 = scmp.lt.s32.totalorder %s23, 1
      %s262 = scalar_select %p261, %s23, 1
      %p263 = scmp.lt.s32.totalorder %s260, 1
      %s264 = scalar_select %p263, %s260, 1
      %s265 = smul.addr %s264, 2
      %s266 = smul.addr %s262, 4
      %s267 = sadd.s32 %s265, %s266
      %s268 = smul.addr %s267, 8
      %s269 = scalar_lea.vmem %s1, %s268
      %p270 = pneg %p82
      %p271 = pneg %p79
      %s272 = sadd.s32 %s22, %s24
      %s273 = smul.u32 2, %s272
      %p274 = scmp.lt.s32.totalorder %s23, 1
      %s275 = scalar_select %p274, %s23, 1
      %p276 = scmp.lt.s32.totalorder %s273, 1
      %s277 = scalar_select %p276, %s273, 1
      %s278 = smul.addr %s277, 2
      %s279 = smul.addr %s275, 4
      %s280 = sadd.s32 %s278, %s279
      %s281 = smul.addr %s280, 8
      %s282 = scalar_lea.vmem %s2, %s281
      %p283 = pneg %p112
      %p284 = pneg %p109
      %p285 = pneg %p140
      %p286 = pneg %p137
      %p287 = scmp.lt.s32.totalorder %s22, 0
      %s288 = scalar_select %p287, %s22, 0
      %p289 = scmp.lt.s32.totalorder %s23, 1
      %s290 = scalar_select %p289, %s23, 1
      %s291 = smul.addr %s288, 2
      %s292 = sadd.s32 %s290, %s291
      %s293 = smul.addr %s292, 4
      %s294 = scalar_lea.vmem %s3, %s293
      %p295 = pneg %p168
      %p296 = pneg %p165
      %p297 = scmp.lt.s32.totalorder %s22, 0
      %s298 = scalar_select %p297, %s22, 0
      %p299 = scmp.lt.s32.totalorder %s23, 1
      %s300 = scalar_select %p299, %s23, 1
      %s301 = smul.addr %s298, 2
      %s302 = sadd.s32 %s300, %s301
      %s303 = smul.addr %s302, 4
      %s304 = scalar_lea.vmem %s4, %s303
      %p305 = pneg %p196
      %p306 = pneg %p193
      %p307 = scmp.lt.s32.totalorder %s22, 0
      %s308 = scalar_select %p307, %s22, 0
      %p309 = scmp.lt.s32.totalorder %s23, 1
      %s310 = scalar_select %p309, %s23, 1
      %s311 = smul.addr %s308, 2
      %s312 = sadd.s32 %s310, %s311
      %s313 = smul.addr %s312, 4
      %s314 = scalar_lea.vmem %s5, %s313
      %s315 = sadd.s32 %s22, %s24
      %s316 = smul.u32 2, %s315
      %p317 = scmp.lt.s32.totalorder %s23, 1
      %s318 = scalar_select %p317, %s23, 1
      %p319 = scmp.lt.s32.totalorder %s316, 1
      %s320 = scalar_select %p319, %s316, 1
      %s321 = smul.addr %s320, 2
      %s322 = smul.addr %s318, 4
      %s323 = sadd.s32 %s321, %s322
      %s324 = smul.addr %s323, 8
      %s325 = scalar_lea.vmem %s1, %s324
      %s326 = sadd.s32 %s22, %s24
      %s327 = smul.u32 2, %s326
      %s328 = sadd.s32 %s22, %s24
      %s329 = smul.u32 2, %s328
      %p330 = scmp.lt.s32.totalorder %s23, 1
      %s331 = scalar_select %p330, %s23, 1
      %p332 = scmp.lt.s32.totalorder %s329, 1
      %s333 = scalar_select %p332, %s329, 1
      %s334 = smul.addr %s333, 2
      %s335 = smul.addr %s331, 4
      %s336 = sadd.s32 %s334, %s335
      %s337 = smul.addr %s336, 8
      %s338 = scalar_lea.vmem %s2, %s337
      %s339 = sadd.s32 %s22, %s24
      %s340 = smul.u32 2, %s339
      %p341 = scmp.lt.s32.totalorder %s22, 0
      %s342 = scalar_select %p341, %s22, 0
      %p343 = scmp.lt.s32.totalorder %s23, 1
      %s344 = scalar_select %p343, %s23, 1
      %s345 = smul.addr %s342, 2
      %s346 = sadd.s32 %s344, %s345
      %s347 = smul.addr %s346, 4
      %s348 = scalar_lea.vmem %s3, %s347
      %p349 = scmp.lt.s32.totalorder %s22, 0
      %s350 = scalar_select %p349, %s22, 0
      %p351 = scmp.lt.s32.totalorder %s23, 1
      %s352 = scalar_select %p351, %s23, 1
      %s353 = smul.addr %s350, 2
      %s354 = sadd.s32 %s352, %s353
      %s355 = smul.addr %s354, 4
      %s356 = scalar_lea.vmem %s4, %s355
      %p357 = scmp.lt.s32.totalorder %s22, 0
      %s358 = scalar_select %p357, %s22, 0
      %p359 = scmp.lt.s32.totalorder %s23, 1
      %s360 = scalar_select %p359, %s23, 1
      %s361 = smul.addr %s358, 2
      %s362 = sadd.s32 %s360, %s361
      %s363 = smul.addr %s362, 4
      %s364 = scalar_lea.vmem %s5, %s363
      %s365 = sadd.s32 %s22, %s24
      %p366 = scmp.eq.s32.totalorder %s24, 0
      // Predicated region
      $region33: #{plane_height_loss.1} parent=31 // pred_check
        %p367 = pneg %p366
      $region34: #{plane_height_loss.1} parent=31 // pred_check_branch
        %369 = sbr.rel (%p367) target = $region36
      $region35: #{plane_height_loss.1} parent=31 // pred_region
        %vm370 = vcmask 18432
        %371 = vst.msk [vmem:[%s348] sm:$0x7] %vm370, 0.0
        %372 = vst.msk [vmem:[%s356] sm:$0x7] %vm370, 0.0
        %373 = vst.msk [vmem:[%s364] sm:$0x7] %vm370, 0.0
      $region36: #{plane_height_loss.1} parent=31 // pred_fallthru
        _
      %v374 = vld [vmem:[%s325] sm:$0xff]
      %v375 = vld [vmem:[%s325 + $0x10] sm:$0xff]
      %v376 = vld [vmem:[%s325 + $0x8] sm:$0xff]
      %v377 = vld [vmem:[%s325 + $0x18] sm:$0xff]
      %380 = vrot.lane.b32.xlu0 %v376, 64
      %v381 = vpop.permute.xlu0 %380
      %382 = vrot.lane.b32.xlu0 %v377, 64
      %v383 = vpop.permute.xlu0 %382
      %v386 = vadd.f32 %v374, %v381
      %v387 = vadd.f32 %v375, %v383
      %v388 = vmul.f32 %v386, 0.5
      %v389 = vmul.f32 %v387, 0.5
      %v390 = vld [vmem:[%s338] sm:$0xff]
      %v391 = vld [vmem:[%s338 + $0x10] sm:$0xff]
      %v392 = vld [vmem:[%s338 + $0x8] sm:$0xff]
      %v393 = vld [vmem:[%s338 + $0x18] sm:$0xff]
      %v394 = vmul.f32 %v390, %v390
      %v395 = vmul.f32 %v391, %v391
      %v396 = vmul.f32 %v394, %v390
      %v397 = vmul.f32 %v395, %v391
      %v398 = vmul.f32 %v392, %v392
      %v399 = vmul.f32 %v393, %v393
      %v400 = vmul.f32 %v398, %v392
      %v401 = vmul.f32 %v399, %v393
      %404 = vrot.lane.b32.xlu0 %v400, 64
      %v405 = vpop.permute.xlu0 %404
      %406 = vrot.lane.b32.xlu0 %v401, 64
      %v407 = vpop.permute.xlu0 %406
      %v410 = vadd.f32 %v396, %v405
      %v411 = vadd.f32 %v397, %v407
      %v412 = vmul.f32 %v410, 0.5
      %v413 = vmul.f32 %v411, 0.5
      %v414 = vld [vmem:[%s0] sm:$0xff]
      %v415 = vld [vmem:[%s0 + $0x8] sm:$0xff]
      %v416 = vld [vmem:[%s0 + $0x10] sm:$0xff]
      %v417 = vld [vmem:[%s0 + $0x18] sm:$0xff]
      %v418 = vld [vmem:[%s0 + $0x20] sm:$0xff]
      %v419 = vld [vmem:[%s0 + $0x28] sm:$0xff]
      %v420 = vld [vmem:[%s0 + $0x30] sm:$0xff]
      %v421 = vld [vmem:[%s0 + $0x38] sm:$0xff]
      %424 = vrot.lane.b32.xlu0 %v388, 64
      %v425 = vpop.permute.xlu0 %424
      %426 = vrot.lane.b32.xlu0 %v389, 64
      %v427 = vpop.permute.xlu0 %426
      %vm428 = vcmask 523264
      %v429 = vsel %vm428, %v425, 0
      %v431 = vsel %vm428, %v427, 0
      %433 = vmatprep.subr.mxu0 0.0
      %434 = vmatpush1.msra.mxu0 %v414
      %435 = vmatprep.subr.mxu0 0.0
      %436 = vmatpush1.msra.mxu0 %v415
      %437 = vmatprep.subr.mxu0 0.0
      %438 = vmatpush1.msra.mxu0 %v416
      %439 = vmatprep.subr.mxu0 0.0
      %440 = vmatpush1.msra.mxu0 %v417
      %441 = vmatprep.subr.mxu0 0.0
      %442 = vmatpush1.msra.mxu0 %v418
      %443 = vmatprep.subr.mxu0 0.0
      %444 = vmatpush1.msra.mxu0 %v419
      %445 = vmatprep.subr.mxu0 0.0
      %446 = vmatpush1.msra.mxu0 %v420
      %447 = vmatprep.subr.mxu0 0.0
      %448 = vmatpush1.msra.mxu0 %v421
      %449 = vmatprep.subr.mxu0 0.0
      %450 = vmatpush1.msra.mxu0 0.0
      %451 = vmatprep.subr.mxu0 0.0
      %452 = vmatpush1.msra.mxu0 0.0
      %453 = vmatprep.subr.mxu0 0.0
      %454 = vmatpush1.msra.mxu0 0.0
      %455 = vmatprep.subr.mxu0 0.0
      %456 = vmatpush1.msra.mxu0 0.0
      %457 = vmatprep.subr.mxu0 0.0
      %458 = vmatpush1.msra.mxu0 0.0
      %459 = vmatprep.subr.mxu0 0.0
      %460 = vmatpush1.msra.mxu0 0.0
      %461 = vmatprep.subr.mxu0 0.0
      %462 = vmatpush1.msra.mxu0 0.0
      %463 = vmatprep.subr.mxu0 0.0
      %464 = vmatpush1.msra.mxu0 0.0
      %465 = vmatprep.subr.mxu0 0.0
      %466 = vmatpush1.msra.mxu0 0.0
      %467 = vmatprep.subr.mxu0 0.0
      %468 = vmatpush1.msra.mxu0 0.0
      %469 = vmatprep.subr.mxu0 0.0
      %470 = vmatpush1.msra.mxu0 0.0
      %471 = vmatprep.subr.mxu0 0.0
      %472 = vmatpush1.msra.mxu0 0.0
      %473 = vmatprep.subr.mxu0 0.0
      %474 = vmatpush1.msra.mxu0 0.0
      %475 = vmatprep.subr.mxu0 0.0
      %476 = vmatpush1.msra.mxu0 0.0
      %477 = vmatprep.subr.mxu0 0.0
      %478 = vmatpush1.msra.mxu0 0.0
      %479 = vmatprep.subr.mxu0 0.0
      %480 = vmatpush1.msra.mxu0 0.0
      %481 = vmatprep.subr.mxu0 0.0
      %482 = vmatpush1.msra.mxu0 0.0
      %483 = vmatprep.subr.mxu0 0.0
      %484 = vmatpush1.msra.mxu0 0.0
      %485 = vmatprep.subr.mxu0 0.0
      %486 = vmatpush1.msra.mxu0 0.0
      %487 = vmatprep.subr.mxu0 0.0
      %488 = vmatpush1.msra.mxu0 0.0
      %489 = vmatprep.subr.mxu0 0.0
      %490 = vmatpush1.msra.mxu0 0.0
      %491 = vmatprep.subr.mxu0 0.0
      %492 = vmatpush1.msra.mxu0 0.0
      %493 = vmatprep.subr.mxu0 0.0
      %494 = vmatpush1.msra.mxu0 0.0
      %495 = vmatprep.subr.mxu0 0.0
      %496 = vmatpush1.msra.mxu0 0.0
      %497 = vmatprep.mubr.f32.mxu0 0.0
      %498 = vmatmul.mubr.f32.gmra.mrb[0].mxu0 %v429
      %v499 = vpop.f32.mrb[0].mxu0
      %v500 = vadd.f32 0.0, %v499
      %v501 = vpop.f32.mrb[0].mxu0
      %502 = vmatprep.mubr.f32.mxu0 0.0
      %503 = vmatmul.mubr.f32.gmra.mrb[0].mxu0 %v431
      %v504 = vpop.f32.mrb[0].mxu0
      %v505 = vadd.f32 0.0, %v504
      %v506 = vpop.f32.mrb[0].mxu0
      %507 = vdwg.mxu0
      %510 = vrot.lane.b32.xlu0 %v412, 64
      %v511 = vpop.permute.xlu0 %510
      %512 = vrot.lane.b32.xlu0 %v413, 64
      %v513 = vpop.permute.xlu0 %512
      %v514 = vsel %vm428, %v511, 0
      %v516 = vsel %vm428, %v513, 0
      %518 = vmatprep.subr.mxu0 0.0
      %519 = vmatpush1.msra.mxu0 %v414
      %520 = vmatprep.subr.mxu0 0.0
      %521 = vmatpush1.msra.mxu0 %v415
      %522 = vmatprep.subr.mxu0 0.0
      %523 = vmatpush1.msra.mxu0 %v416
      %524 = vmatprep.subr.mxu0 0.0
      %525 = vmatpush1.msra.mxu0 %v417
      %526 = vmatprep.subr.mxu0 0.0
      %527 = vmatpush1.msra.mxu0 %v418
      %528 = vmatprep.subr.mxu0 0.0
      %529 = vmatpush1.msra.mxu0 %v419
      %530 = vmatprep.subr.mxu0 0.0
      %531 = vmatpush1.msra.mxu0 %v420
      %532 = vmatprep.subr.mxu0 0.0
      %533 = vmatpush1.msra.mxu0 %v421
      %534 = vmatprep.subr.mxu0 0.0
      %535 = vmatpush1.msra.mxu0 0.0
      %536 = vmatprep.subr.mxu0 0.0
      %537 = vmatpush1.msra.mxu0 0.0
      %538 = vmatprep.subr.mxu0 0.0
      %539 = vmatpush1.msra.mxu0 0.0
      %540 = vmatprep.subr.mxu0 0.0
      %541 = vmatpush1.msra.mxu0 0.0
      %542 = vmatprep.subr.mxu0 0.0
      %543 = vmatpush1.msra.mxu0 0.0
      %544 = vmatprep.subr.mxu0 0.0
      %545 = vmatpush1.msra.mxu0 0.0
      %546 = vmatprep.subr.mxu0 0.0
      %547 = vmatpush1.msra.mxu0 0.0
      %548 = vmatprep.subr.mxu0 0.0
      %549 = vmatpush1.msra.mxu0 0.0
      %550 = vmatprep.subr.mxu0 0.0
      %551 = vmatpush1.msra.mxu0 0.0
      %552 = vmatprep.subr.mxu0 0.0
      %553 = vmatpush1.msra.mxu0 0.0
      %554 = vmatprep.subr.mxu0 0.0
      %555 = vmatpush1.msra.mxu0 0.0
      %556 = vmatprep.subr.mxu0 0.0
      %557 = vmatpush1.msra.mxu0 0.0
      %558 = vmatprep.subr.mxu0 0.0
      %559 = vmatpush1.msra.mxu0 0.0
      %560 = vmatprep.subr.mxu0 0.0
      %561 = vmatpush1.msra.mxu0 0.0
      %562 = vmatprep.subr.mxu0 0.0
      %563 = vmatpush1.msra.mxu0 0.0
      %564 = vmatprep.subr.mxu0 0.0
      %565 = vmatpush1.msra.mxu0 0.0
      %566 = vmatprep.subr.mxu0 0.0
      %567 = vmatpush1.msra.mxu0 0.0
      %568 = vmatprep.subr.mxu0 0.0
      %569 = vmatpush1.msra.mxu0 0.0
      %570 = vmatprep.subr.mxu0 0.0
      %571 = vmatpush1.msra.mxu0 0.0
      %572 = vmatprep.subr.mxu0 0.0
      %573 = vmatpush1.msra.mxu0 0.0
      %574 = vmatprep.subr.mxu0 0.0
      %575 = vmatpush1.msra.mxu0 0.0
      %576 = vmatprep.subr.mxu0 0.0
      %577 = vmatpush1.msra.mxu0 0.0
      %578 = vmatprep.subr.mxu0 0.0
      %579 = vmatpush1.msra.mxu0 0.0
      %580 = vmatprep.subr.mxu0 0.0
      %581 = vmatpush1.msra.mxu0 0.0
      %582 = vmatprep.mubr.f32.mxu0 0.0
      %583 = vmatmul.mubr.f32.gmra.mrb[0].mxu0 %v514
      %v584 = vpop.f32.mrb[0].mxu0
      %v585 = vadd.f32 0.0, %v584
      %v586 = vpop.f32.mrb[0].mxu0
      %587 = vmatprep.mubr.f32.mxu0 0.0
      %588 = vmatmul.mubr.f32.gmra.mrb[0].mxu0 %v516
      %v589 = vpop.f32.mrb[0].mxu0
      %v590 = vadd.f32 0.0, %v589
      %v591 = vpop.f32.mrb[0].mxu0
      %592 = vdwg.mxu0
      %v593 = vmul.f32 %v585, %v500
      %v594 = vmul.f32 %v590, %v505
      %v595 = vmul.f32 %v593, %v500
      %v596 = vmul.f32 %v594, %v505
      %v597 = vlaneseq
      %v598 = vand.u32 %v597, 127
      %s599 = smul.u32 %s365, 16
      %v600 = vstv %s599
      %v601 = vadd.s32 %v598, %v600
      %v602 = vcvt.s32.f32 %v601
      %v603 = vlaneseq
      %v604 = vshrl.u32 %v603, 7
      %vm605 = vcmp.eq.s32.totalorder %v604, 0
      %vm606 = vcmp.eq.s32.totalorder %v604, 1
      %v607 = vmul.f32 %v602, %v602
      %v608 = vsel %vm606, %v602, %v607
      %v609 = vsel %vm605, 1.0, %v608
      %v610 = vadd.s32 %v604, 8
      %v611 = vcvt.s32.f32 %v604
      %v612 = vcvt.s32.f32 %v610
      %vm613 = vcmp.eq.s32.totalorder %v598, 0
      %vm614 = vcmp.eq.s32.totalorder %v598, 1
      %v615 = vmul.f32 %v611, %v611
      %v616 = vmul.f32 %v612, %v612
      %v617 = vsel %vm614, %v611, %v615
      %v618 = vsel %vm614, %v612, %v616
      %v619 = vsel %vm613, 1.0, %v617
      %v620 = vsel %vm613, 1.0, %v618
      %v621 = vld [vmem:[%s348] sm:$0x7]
      %vm622 = vcmask 130048
      %v624 = vsel %vm622, %v595, 0
      %v627 = vsel %vm622, %v596, 0
      %629 = vmatprep.subr.mxu0 0.0
      %630 = vmatpush1.msra.mxu0 %v619
      %631 = vmatprep.subr.mxu0 0.0
      %632 = vmatpush1.msra.mxu0 %v620
      %633 = vmatprep.subr.mxu0 0.0
      %634 = vmatpush1.msra.mxu0 0.0
      %635 = vmatprep.subr.mxu0 0.0
      %636 = vmatpush1.msra.mxu0 0.0
      %637 = vmatprep.subr.mxu0 0.0
      %638 = vmatpush1.msra.mxu0 0.0
      %639 = vmatprep.subr.mxu0 0.0
      %640 = vmatpush1.msra.mxu0 0.0
      %641 = vmatprep.subr.mxu0 0.0
      %642 = vmatpush1.msra.mxu0 0.0
      %643 = vmatprep.subr.mxu0 0.0
      %644 = vmatpush1.msra.mxu0 0.0
      %645 = vmatprep.subr.mxu0 0.0
      %646 = vmatpush1.msra.mxu0 0.0
      %647 = vmatprep.subr.mxu0 0.0
      %648 = vmatpush1.msra.mxu0 0.0
      %649 = vmatprep.subr.mxu0 0.0
      %650 = vmatpush1.msra.mxu0 0.0
      %651 = vmatprep.subr.mxu0 0.0
      %652 = vmatpush1.msra.mxu0 0.0
      %653 = vmatprep.subr.mxu0 0.0
      %654 = vmatpush1.msra.mxu0 0.0
      %655 = vmatprep.subr.mxu0 0.0
      %656 = vmatpush1.msra.mxu0 0.0
      %657 = vmatprep.subr.mxu0 0.0
      %658 = vmatpush1.msra.mxu0 0.0
      %659 = vmatprep.subr.mxu0 0.0
      %660 = vmatpush1.msra.mxu0 0.0
      %661 = vmatprep.subr.mxu0 0.0
      %662 = vmatpush1.msra.mxu0 0.0
      %663 = vmatprep.subr.mxu0 0.0
      %664 = vmatpush1.msra.mxu0 0.0
      %665 = vmatprep.subr.mxu0 0.0
      %666 = vmatpush1.msra.mxu0 0.0
      %667 = vmatprep.subr.mxu0 0.0
      %668 = vmatpush1.msra.mxu0 0.0
      %669 = vmatprep.subr.mxu0 0.0
      %670 = vmatpush1.msra.mxu0 0.0
      %671 = vmatprep.subr.mxu0 0.0
      %672 = vmatpush1.msra.mxu0 0.0
      %673 = vmatprep.subr.mxu0 0.0
      %674 = vmatpush1.msra.mxu0 0.0
      %675 = vmatprep.subr.mxu0 0.0
      %676 = vmatpush1.msra.mxu0 0.0
      %677 = vmatprep.subr.mxu0 0.0
      %678 = vmatpush1.msra.mxu0 0.0
      %679 = vmatprep.subr.mxu0 0.0
      %680 = vmatpush1.msra.mxu0 0.0
      %681 = vmatprep.subr.mxu0 0.0
      %682 = vmatpush1.msra.mxu0 0.0
      %683 = vmatprep.subr.mxu0 0.0
      %684 = vmatpush1.msra.mxu0 0.0
      %685 = vmatprep.subr.mxu0 0.0
      %686 = vmatpush1.msra.mxu0 0.0
      %687 = vmatprep.subr.mxu0 0.0
      %688 = vmatpush1.msra.mxu0 0.0
      %689 = vmatprep.subr.mxu0 0.0
      %690 = vmatpush1.msra.mxu0 0.0
      %691 = vmatprep.subr.mxu0 0.0
      %692 = vmatpush1.msra.mxu0 0.0
      %693 = vmatprep.mubr.f32.mxu0 0.0
      %694 = vmatmul.mubr.f32.gmra.mrb[0].mxu0 %v624
      %v695 = vpop.f32.mrb[0].mxu0
      %v696 = vadd.f32 0.0, %v695
      %v697 = vpop.f32.mrb[0].mxu0
      %698 = vmatprep.mubr.f32.mxu0 0.0
      %699 = vmatmul.mubr.f32.gmra.mrb[0].mxu0 %v627
      %v700 = vpop.f32.mrb[0].mxu0
      %v701 = vadd.f32 0.0, %v700
      %v702 = vpop.f32.mrb[0].mxu0
      %703 = vdwg.mxu0
      %v705 = vsel %vm622, %v609, 0
      %707 = vmatprep.subr.mxu0 0.0
      %708 = vmatpush1.msra.mxu0 %v696
      %709 = vmatprep.subr.mxu0 0.0
      %710 = vmatpush1.msra.mxu0 %v701
      %711 = vmatprep.subr.mxu0 0.0
      %712 = vmatpush1.msra.mxu0 0.0
      %713 = vmatprep.subr.mxu0 0.0
      %714 = vmatpush1.msra.mxu0 0.0
      %715 = vmatprep.subr.mxu0 0.0
      %716 = vmatpush1.msra.mxu0 0.0
      %717 = vmatprep.subr.mxu0 0.0
      %718 = vmatpush1.msra.mxu0 0.0
      %719 = vmatprep.subr.mxu0 0.0
      %720 = vmatpush1.msra.mxu0 0.0
      %721 = vmatprep.subr.mxu0 0.0
      %722 = vmatpush1.msra.mxu0 0.0
      %723 = vmatprep.subr.mxu0 0.0
      %724 = vmatpush1.msra.mxu0 0.0
      %725 = vmatprep.subr.mxu0 0.0
      %726 = vmatpush1.msra.mxu0 0.0
      %727 = vmatprep.subr.mxu0 0.0
      %728 = vmatpush1.msra.mxu0 0.0
      %729 = vmatprep.subr.mxu0 0.0
      %730 = vmatpush1.msra.mxu0 0.0
      %731 = vmatprep.subr.mxu0 0.0
      %732 = vmatpush1.msra.mxu0 0.0
      %733 = vmatprep.subr.mxu0 0.0
      %734 = vmatpush1.msra.mxu0 0.0
      %735 = vmatprep.subr.mxu0 0.0
      %736 = vmatpush1.msra.mxu0 0.0
      %737 = vmatprep.subr.mxu0 0.0
      %738 = vmatpush1.msra.mxu0 0.0
      %739 = vmatprep.subr.mxu0 0.0
      %740 = vmatpush1.msra.mxu0 0.0
      %741 = vmatprep.subr.mxu0 0.0
      %742 = vmatpush1.msra.mxu0 0.0
      %743 = vmatprep.subr.mxu0 0.0
      %744 = vmatpush1.msra.mxu0 0.0
      %745 = vmatprep.subr.mxu0 0.0
      %746 = vmatpush1.msra.mxu0 0.0
      %747 = vmatprep.subr.mxu0 0.0
      %748 = vmatpush1.msra.mxu0 0.0
      %749 = vmatprep.subr.mxu0 0.0
      %750 = vmatpush1.msra.mxu0 0.0
      %751 = vmatprep.subr.mxu0 0.0
      %752 = vmatpush1.msra.mxu0 0.0
      %753 = vmatprep.subr.mxu0 0.0
      %754 = vmatpush1.msra.mxu0 0.0
      %755 = vmatprep.subr.mxu0 0.0
      %756 = vmatpush1.msra.mxu0 0.0
      %757 = vmatprep.subr.mxu0 0.0
      %758 = vmatpush1.msra.mxu0 0.0
      %759 = vmatprep.subr.mxu0 0.0
      %760 = vmatpush1.msra.mxu0 0.0
      %761 = vmatprep.subr.mxu0 0.0
      %762 = vmatpush1.msra.mxu0 0.0
      %763 = vmatprep.subr.mxu0 0.0
      %764 = vmatpush1.msra.mxu0 0.0
      %765 = vmatprep.subr.mxu0 0.0
      %766 = vmatpush1.msra.mxu0 0.0
      %767 = vmatprep.subr.mxu0 0.0
      %768 = vmatpush1.msra.mxu0 0.0
      %769 = vmatprep.subr.mxu0 0.0
      %770 = vmatpush1.msra.mxu0 0.0
      %771 = vmatprep.mubr.f32.mxu0 0.0
      %772 = vmatmul.mubr.f32.gmra.mrb[0].mxu0 %v705
      %v773 = vpop.f32.mrb[0].mxu0
      %v774 = vadd.f32 0.0, %v773
      %v775 = vpop.f32.mrb[0].mxu0
      %776 = vdwg.mxu0
      %v777 = vadd.f32 %v621, %v774
      %vm778 = vcmask 18432
      %779 = vst.msk [vmem:[%s348] sm:$0x7] %vm778, %v777
      %v780 = vld [vmem:[%s356] sm:$0x7]
      %v782 = vsel %vm622, %v593, 0
      %v785 = vsel %vm622, %v594, 0
      %787 = vmatprep.subr.mxu0 0.0
      %788 = vmatpush1.msra.mxu0 %v619
      %789 = vmatprep.subr.mxu0 0.0
      %790 = vmatpush1.msra.mxu0 %v620
      %791 = vmatprep.subr.mxu0 0.0
      %792 = vmatpush1.msra.mxu0 0.0
      %793 = vmatprep.subr.mxu0 0.0
      %794 = vmatpush1.msra.mxu0 0.0
      %795 = vmatprep.subr.mxu0 0.0
      %796 = vmatpush1.msra.mxu0 0.0
      %797 = vmatprep.subr.mxu0 0.0
      %798 = vmatpush1.msra.mxu0 0.0
      %799 = vmatprep.subr.mxu0 0.0
      %800 = vmatpush1.msra.mxu0 0.0
      %801 = vmatprep.subr.mxu0 0.0
      %802 = vmatpush1.msra.mxu0 0.0
      %803 = vmatprep.subr.mxu0 0.0
      %804 = vmatpush1.msra.mxu0 0.0
      %805 = vmatprep.subr.mxu0 0.0
      %806 = vmatpush1.msra.mxu0 0.0
      %807 = vmatprep.subr.mxu0 0.0
      %808 = vmatpush1.msra.mxu0 0.0
      %809 = vmatprep.subr.mxu0 0.0
      %810 = vmatpush1.msra.mxu0 0.0
      %811 = vmatprep.subr.mxu0 0.0
      %812 = vmatpush1.msra.mxu0 0.0
      %813 = vmatprep.subr.mxu0 0.0
      %814 = vmatpush1.msra.mxu0 0.0
      %815 = vmatprep.subr.mxu0 0.0
      %816 = vmatpush1.msra.mxu0 0.0
      %817 = vmatprep.subr.mxu0 0.0
      %818 = vmatpush1.msra.mxu0 0.0
      %819 = vmatprep.subr.mxu0 0.0
      %820 = vmatpush1.msra.mxu0 0.0
      %821 = vmatprep.subr.mxu0 0.0
      %822 = vmatpush1.msra.mxu0 0.0
      %823 = vmatprep.subr.mxu0 0.0
      %824 = vmatpush1.msra.mxu0 0.0
      %825 = vmatprep.subr.mxu0 0.0
      %826 = vmatpush1.msra.mxu0 0.0
      %827 = vmatprep.subr.mxu0 0.0
      %828 = vmatpush1.msra.mxu0 0.0
      %829 = vmatprep.subr.mxu0 0.0
      %830 = vmatpush1.msra.mxu0 0.0
      %831 = vmatprep.subr.mxu0 0.0
      %832 = vmatpush1.msra.mxu0 0.0
      %833 = vmatprep.subr.mxu0 0.0
      %834 = vmatpush1.msra.mxu0 0.0
      %835 = vmatprep.subr.mxu0 0.0
      %836 = vmatpush1.msra.mxu0 0.0
      %837 = vmatprep.subr.mxu0 0.0
      %838 = vmatpush1.msra.mxu0 0.0
      %839 = vmatprep.subr.mxu0 0.0
      %840 = vmatpush1.msra.mxu0 0.0
      %841 = vmatprep.subr.mxu0 0.0
      %842 = vmatpush1.msra.mxu0 0.0
      %843 = vmatprep.subr.mxu0 0.0
      %844 = vmatpush1.msra.mxu0 0.0
      %845 = vmatprep.subr.mxu0 0.0
      %846 = vmatpush1.msra.mxu0 0.0
      %847 = vmatprep.subr.mxu0 0.0
      %848 = vmatpush1.msra.mxu0 0.0
      %849 = vmatprep.subr.mxu0 0.0
      %850 = vmatpush1.msra.mxu0 0.0
      %851 = vmatprep.mubr.f32.mxu0 0.0
      %852 = vmatmul.mubr.f32.gmra.mrb[0].mxu0 %v782
      %v853 = vpop.f32.mrb[0].mxu0
      %v854 = vadd.f32 0.0, %v853
      %v855 = vpop.f32.mrb[0].mxu0
      %856 = vmatprep.mubr.f32.mxu0 0.0
      %857 = vmatmul.mubr.f32.gmra.mrb[0].mxu0 %v785
      %v858 = vpop.f32.mrb[0].mxu0
      %v859 = vadd.f32 0.0, %v858
      %v860 = vpop.f32.mrb[0].mxu0
      %861 = vdwg.mxu0
      %862 = vmatprep.subr.mxu0 0.0
      %863 = vmatpush1.msra.mxu0 %v854
      %864 = vmatprep.subr.mxu0 0.0
      %865 = vmatpush1.msra.mxu0 %v859
      %866 = vmatprep.subr.mxu0 0.0
      %867 = vmatpush1.msra.mxu0 0.0
      %868 = vmatprep.subr.mxu0 0.0
      %869 = vmatpush1.msra.mxu0 0.0
      %870 = vmatprep.subr.mxu0 0.0
      %871 = vmatpush1.msra.mxu0 0.0
      %872 = vmatprep.subr.mxu0 0.0
      %873 = vmatpush1.msra.mxu0 0.0
      %874 = vmatprep.subr.mxu0 0.0
      %875 = vmatpush1.msra.mxu0 0.0
      %876 = vmatprep.subr.mxu0 0.0
      %877 = vmatpush1.msra.mxu0 0.0
      %878 = vmatprep.subr.mxu0 0.0
      %879 = vmatpush1.msra.mxu0 0.0
      %880 = vmatprep.subr.mxu0 0.0
      %881 = vmatpush1.msra.mxu0 0.0
      %882 = vmatprep.subr.mxu0 0.0
      %883 = vmatpush1.msra.mxu0 0.0
      %884 = vmatprep.subr.mxu0 0.0
      %885 = vmatpush1.msra.mxu0 0.0
      %886 = vmatprep.subr.mxu0 0.0
      %887 = vmatpush1.msra.mxu0 0.0
      %888 = vmatprep.subr.mxu0 0.0
      %889 = vmatpush1.msra.mxu0 0.0
      %890 = vmatprep.subr.mxu0 0.0
      %891 = vmatpush1.msra.mxu0 0.0
      %892 = vmatprep.subr.mxu0 0.0
      %893 = vmatpush1.msra.mxu0 0.0
      %894 = vmatprep.subr.mxu0 0.0
      %895 = vmatpush1.msra.mxu0 0.0
      %896 = vmatprep.subr.mxu0 0.0
      %897 = vmatpush1.msra.mxu0 0.0
      %898 = vmatprep.subr.mxu0 0.0
      %899 = vmatpush1.msra.mxu0 0.0
      %900 = vmatprep.subr.mxu0 0.0
      %901 = vmatpush1.msra.mxu0 0.0
      %902 = vmatprep.subr.mxu0 0.0
      %903 = vmatpush1.msra.mxu0 0.0
      %904 = vmatprep.subr.mxu0 0.0
      %905 = vmatpush1.msra.mxu0 0.0
      %906 = vmatprep.subr.mxu0 0.0
      %907 = vmatpush1.msra.mxu0 0.0
      %908 = vmatprep.subr.mxu0 0.0
      %909 = vmatpush1.msra.mxu0 0.0
      %910 = vmatprep.subr.mxu0 0.0
      %911 = vmatpush1.msra.mxu0 0.0
      %912 = vmatprep.subr.mxu0 0.0
      %913 = vmatpush1.msra.mxu0 0.0
      %914 = vmatprep.subr.mxu0 0.0
      %915 = vmatpush1.msra.mxu0 0.0
      %916 = vmatprep.subr.mxu0 0.0
      %917 = vmatpush1.msra.mxu0 0.0
      %918 = vmatprep.subr.mxu0 0.0
      %919 = vmatpush1.msra.mxu0 0.0
      %920 = vmatprep.subr.mxu0 0.0
      %921 = vmatpush1.msra.mxu0 0.0
      %922 = vmatprep.subr.mxu0 0.0
      %923 = vmatpush1.msra.mxu0 0.0
      %924 = vmatprep.subr.mxu0 0.0
      %925 = vmatpush1.msra.mxu0 0.0
      %926 = vmatprep.mubr.f32.mxu0 0.0
      %927 = vmatmul.mubr.f32.gmra.mrb[0].mxu0 %v705
      %v928 = vpop.f32.mrb[0].mxu0
      %v929 = vadd.f32 0.0, %v928
      %v930 = vpop.f32.mrb[0].mxu0
      %931 = vdwg.mxu0
      %v932 = vadd.f32 %v780, %v929
      %933 = vst.msk [vmem:[%s356] sm:$0x7] %vm778, %v932
      %v934 = vld [vmem:[%s364] sm:$0x7]
      %v936 = vsel %vm622, %v585, 0
      %v939 = vsel %vm622, %v590, 0
      %941 = vmatprep.subr.mxu0 0.0
      %942 = vmatpush1.msra.mxu0 %v619
      %943 = vmatprep.subr.mxu0 0.0
      %944 = vmatpush1.msra.mxu0 %v620
      %945 = vmatprep.subr.mxu0 0.0
      %946 = vmatpush1.msra.mxu0 0.0
      %947 = vmatprep.subr.mxu0 0.0
      %948 = vmatpush1.msra.mxu0 0.0
      %949 = vmatprep.subr.mxu0 0.0
      %950 = vmatpush1.msra.mxu0 0.0
      %951 = vmatprep.subr.mxu0 0.0
      %952 = vmatpush1.msra.mxu0 0.0
      %953 = vmatprep.subr.mxu0 0.0
      %954 = vmatpush1.msra.mxu0 0.0
      %955 = vmatprep.subr.mxu0 0.0
      %956 = vmatpush1.msra.mxu0 0.0
      %957 = vmatprep.subr.mxu0 0.0
      %958 = vmatpush1.msra.mxu0 0.0
      %959 = vmatprep.subr.mxu0 0.0
      %960 = vmatpush1.msra.mxu0 0.0
      %961 = vmatprep.subr.mxu0 0.0
      %962 = vmatpush1.msra.mxu0 0.0
      %963 = vmatprep.subr.mxu0 0.0
      %964 = vmatpush1.msra.mxu0 0.0
      %965 = vmatprep.subr.mxu0 0.0
      %966 = vmatpush1.msra.mxu0 0.0
      %967 = vmatprep.subr.mxu0 0.0
      %968 = vmatpush1.msra.mxu0 0.0
      %969 = vmatprep.subr.mxu0 0.0
      %970 = vmatpush1.msra.mxu0 0.0
      %971 = vmatprep.subr.mxu0 0.0
      %972 = vmatpush1.msra.mxu0 0.0
      %973 = vmatprep.subr.mxu0 0.0
      %974 = vmatpush1.msra.mxu0 0.0
      %975 = vmatprep.subr.mxu0 0.0
      %976 = vmatpush1.msra.mxu0 0.0
      %977 = vmatprep.subr.mxu0 0.0
      %978 = vmatpush1.msra.mxu0 0.0
      %979 = vmatprep.subr.mxu0 0.0
      %980 = vmatpush1.msra.mxu0 0.0
      %981 = vmatprep.subr.mxu0 0.0
      %982 = vmatpush1.msra.mxu0 0.0
      %983 = vmatprep.subr.mxu0 0.0
      %984 = vmatpush1.msra.mxu0 0.0
      %985 = vmatprep.subr.mxu0 0.0
      %986 = vmatpush1.msra.mxu0 0.0
      %987 = vmatprep.subr.mxu0 0.0
      %988 = vmatpush1.msra.mxu0 0.0
      %989 = vmatprep.subr.mxu0 0.0
      %990 = vmatpush1.msra.mxu0 0.0
      %991 = vmatprep.subr.mxu0 0.0
      %992 = vmatpush1.msra.mxu0 0.0
      %993 = vmatprep.subr.mxu0 0.0
      %994 = vmatpush1.msra.mxu0 0.0
      %995 = vmatprep.subr.mxu0 0.0
      %996 = vmatpush1.msra.mxu0 0.0
      %997 = vmatprep.subr.mxu0 0.0
      %998 = vmatpush1.msra.mxu0 0.0
      %999 = vmatprep.subr.mxu0 0.0
      %1000 = vmatpush1.msra.mxu0 0.0
      %1001 = vmatprep.subr.mxu0 0.0
      %1002 = vmatpush1.msra.mxu0 0.0
      %1003 = vmatprep.subr.mxu0 0.0
      %1004 = vmatpush1.msra.mxu0 0.0
      %1005 = vmatprep.mubr.f32.mxu0 0.0
      %1006 = vmatmul.mubr.f32.gmra.mrb[0].mxu0 %v936
      %v1007 = vpop.f32.mrb[0].mxu0
      %v1008 = vadd.f32 0.0, %v1007
      %v1009 = vpop.f32.mrb[0].mxu0
      %1010 = vmatprep.mubr.f32.mxu0 0.0
      %1011 = vmatmul.mubr.f32.gmra.mrb[0].mxu0 %v939
      %v1012 = vpop.f32.mrb[0].mxu0
      %v1013 = vadd.f32 0.0, %v1012
      %v1014 = vpop.f32.mrb[0].mxu0
      %1015 = vdwg.mxu0
      %1016 = vmatprep.subr.mxu0 0.0
      %1017 = vmatpush1.msra.mxu0 %v1008
      %1018 = vmatprep.subr.mxu0 0.0
      %1019 = vmatpush1.msra.mxu0 %v1013
      %1020 = vmatprep.subr.mxu0 0.0
      %1021 = vmatpush1.msra.mxu0 0.0
      %1022 = vmatprep.subr.mxu0 0.0
      %1023 = vmatpush1.msra.mxu0 0.0
      %1024 = vmatprep.subr.mxu0 0.0
      %1025 = vmatpush1.msra.mxu0 0.0
      %1026 = vmatprep.subr.mxu0 0.0
      %1027 = vmatpush1.msra.mxu0 0.0
      %1028 = vmatprep.subr.mxu0 0.0
      %1029 = vmatpush1.msra.mxu0 0.0
      %1030 = vmatprep.subr.mxu0 0.0
      %1031 = vmatpush1.msra.mxu0 0.0
      %1032 = vmatprep.subr.mxu0 0.0
      %1033 = vmatpush1.msra.mxu0 0.0
      %1034 = vmatprep.subr.mxu0 0.0
      %1035 = vmatpush1.msra.mxu0 0.0
      %1036 = vmatprep.subr.mxu0 0.0
      %1037 = vmatpush1.msra.mxu0 0.0
      %1038 = vmatprep.subr.mxu0 0.0
      %1039 = vmatpush1.msra.mxu0 0.0
      %1040 = vmatprep.subr.mxu0 0.0
      %1041 = vmatpush1.msra.mxu0 0.0
      %1042 = vmatprep.subr.mxu0 0.0
      %1043 = vmatpush1.msra.mxu0 0.0
      %1044 = vmatprep.subr.mxu0 0.0
      %1045 = vmatpush1.msra.mxu0 0.0
      %1046 = vmatprep.subr.mxu0 0.0
      %1047 = vmatpush1.msra.mxu0 0.0
      %1048 = vmatprep.subr.mxu0 0.0
      %1049 = vmatpush1.msra.mxu0 0.0
      %1050 = vmatprep.subr.mxu0 0.0
      %1051 = vmatpush1.msra.mxu0 0.0
      %1052 = vmatprep.subr.mxu0 0.0
      %1053 = vmatpush1.msra.mxu0 0.0
      %1054 = vmatprep.subr.mxu0 0.0
      %1055 = vmatpush1.msra.mxu0 0.0
      %1056 = vmatprep.subr.mxu0 0.0
      %1057 = vmatpush1.msra.mxu0 0.0
      %1058 = vmatprep.subr.mxu0 0.0
      %1059 = vmatpush1.msra.mxu0 0.0
      %1060 = vmatprep.subr.mxu0 0.0
      %1061 = vmatpush1.msra.mxu0 0.0
      %1062 = vmatprep.subr.mxu0 0.0
      %1063 = vmatpush1.msra.mxu0 0.0
      %1064 = vmatprep.subr.mxu0 0.0
      %1065 = vmatpush1.msra.mxu0 0.0
      %1066 = vmatprep.subr.mxu0 0.0
      %1067 = vmatpush1.msra.mxu0 0.0
      %1068 = vmatprep.subr.mxu0 0.0
      %1069 = vmatpush1.msra.mxu0 0.0
      %1070 = vmatprep.subr.mxu0 0.0
      %1071 = vmatpush1.msra.mxu0 0.0
      %1072 = vmatprep.subr.mxu0 0.0
      %1073 = vmatpush1.msra.mxu0 0.0
      %1074 = vmatprep.subr.mxu0 0.0
      %1075 = vmatpush1.msra.mxu0 0.0
      %1076 = vmatprep.subr.mxu0 0.0
      %1077 = vmatpush1.msra.mxu0 0.0
      %1078 = vmatprep.subr.mxu0 0.0
      %1079 = vmatpush1.msra.mxu0 0.0
      %1080 = vmatprep.mubr.f32.mxu0 0.0
      %1081 = vmatmul.mubr.f32.gmra.mrb[0].mxu0 %v705
      %v1082 = vpop.f32.mrb[0].mxu0
      %v1083 = vadd.f32 0.0, %v1082
      %v1084 = vpop.f32.mrb[0].mxu0
      %1085 = vdwg.mxu0
      %v1086 = vadd.f32 %v934, %v1083
      %1087 = vst.msk [vmem:[%s364] sm:$0x7] %vm778, %v1086
      %p1088 = scmp.lt.s32.totalorder %s22, 0
      %s1089 = scalar_select %p1088, %s22, 0
      %p1090 = scmp.lt.s32.totalorder %s23, 1
      %s1091 = scalar_select %p1090, %s23, 1
      %s1092 = smul.addr %s1089, 2
      %s1093 = sadd.s32 %s1091, %s1092
      %s1094 = smul.addr %s1093, 4
      %s1095 = scalar_lea.vmem %s3, %s1094
      %p1096 = scmp.lt.s32.totalorder %s22, 0
      %s1097 = scalar_select %p1096, %s22, 0
      %p1098 = scmp.lt.s32.totalorder %s23, 1
      %s1099 = scalar_select %p1098, %s23, 1
      %s1100 = smul.addr %s1097, 2
      %s1101 = sadd.s32 %s1099, %s1100
      %s1102 = smul.addr %s1101, 4
      %s1103 = scalar_lea.vmem %s4, %s1102
      %p1104 = scmp.lt.s32.totalorder %s22, 0
      %s1105 = scalar_select %p1104, %s22, 0
      %p1106 = scmp.lt.s32.totalorder %s23, 1
      %s1107 = scalar_select %p1106, %s23, 1
      %s1108 = smul.addr %s1105, 2
      %s1109 = sadd.s32 %s1107, %s1108
      %s1110 = smul.addr %s1109, 4
      %s1111 = scalar_lea.vmem %s5, %s1110
      // Predicated region
      $region37: #{plane_height_loss.1} parent=31 // pred_check
        %p1112 = pneg %p137
      $region38: #{plane_height_loss.1} parent=31 // pred_check_branch
        %1114 = sbr.rel (%p1112) target = $region40
      $region39: #{plane_height_loss.1} parent=31 // pred_region
        _
      $region40: #{plane_height_loss.1} parent=31 // pred_fallthru
        _
      // Predicated region
      $region41: #{plane_height_loss.1} parent=31 // pred_check
        %p1115 = pneg %p165
      $region42: #{plane_height_loss.1} parent=31 // pred_check_branch
        %1117 = sbr.rel (%p1115) target = $region44
      $region43: #{plane_height_loss.1} parent=31 // pred_region
        _
      $region44: #{plane_height_loss.1} parent=31 // pred_fallthru
        _
      // Predicated region
      $region45: #{plane_height_loss.1} parent=31 // pred_check
        %p1118 = pneg %p193
      $region46: #{plane_height_loss.1} parent=31 // pred_check_branch
        %1120 = sbr.rel (%p1118) target = $region48
      $region47: #{plane_height_loss.1} parent=31 // pred_region
        _
      $region48: #{plane_height_loss.1} parent=31 // pred_fallthru
        _
    $region32: #{plane_height_loss.1} parent=5 // pred_fallthru
      _
    %p1121 = scmp.le.s32.totalorder 2, %s12
    // Predicated region
    $region49: #{plane_height_loss.1} parent=5 // pred_check
      %p1122 = pneg %p1121
    $region50: #{plane_height_loss.1} parent=5 // pred_check_branch
      %1124 = sbr.rel (%p1122) target = $region52
    $region51: #{plane_height_loss.1} parent=5 // pred_region
      %s1125 = ssub.s32 %s12, 2
      // Predicated region
      $region53: #{plane_height_loss.1} parent=51 // pred_check
        %p1126 = pneg %p143
      $region54: #{plane_height_loss.1} parent=51 // pred_check_branch
        %1128 = sbr.rel (%p1126) target = $region56
      $region55: #{plane_height_loss.1} parent=51 // pred_region
        %p1129 = scmp.lt.s32.totalorder %s25, 0
        %s1130 = scalar_select %p1129, %s25, 0
        %p1131 = scmp.lt.s32.totalorder %s26, 1
        %s1132 = scalar_select %p1131, %s26, 1
        %s1133 = smul.addr %s1130, 2
        %s1134 = sadd.s32 %s1132, %s1133
        %s1135 = smul.addr %s1134, 4
        %s1136 = scalar_lea.vmem %s3, %s1135
      $region56: #{plane_height_loss.1} parent=51 // pred_fallthru
        _
      // Predicated region
      $region57: #{plane_height_loss.1} parent=51 // pred_check
        %p1137 = pneg %p171
      $region58: #{plane_height_loss.1} parent=51 // pred_check_branch
        %1139 = sbr.rel (%p1137) target = $region60
      $region59: #{plane_height_loss.1} parent=51 // pred_region
        %p1140 = scmp.lt.s32.totalorder %s25, 0
        %s1141 = scalar_select %p1140, %s25, 0
        %p1142 = scmp.lt.s32.totalorder %s26, 1
        %s1143 = scalar_select %p1142, %s26, 1
        %s1144 = smul.addr %s1141, 2
        %s1145 = sadd.s32 %s1143, %s1144
        %s1146 = smul.addr %s1145, 4
        %s1147 = scalar_lea.vmem %s4, %s1146
      $region60: #{plane_height_loss.1} parent=51 // pred_fallthru
        _
      // Predicated region
      $region61: #{plane_height_loss.1} parent=51 // pred_check
        %p1148 = pneg %p199
      $region62: #{plane_height_loss.1} parent=51 // pred_check_branch
        %1150 = sbr.rel (%p1148) target = $region64
      $region63: #{plane_height_loss.1} parent=51 // pred_region
        %p1151 = scmp.lt.s32.totalorder %s25, 0
        %s1152 = scalar_select %p1151, %s25, 0
        %p1153 = scmp.lt.s32.totalorder %s26, 1
        %s1154 = scalar_select %p1153, %s26, 1
        %s1155 = smul.addr %s1152, 2
        %s1156 = sadd.s32 %s1154, %s1155
        %s1157 = smul.addr %s1156, 4
        %s1158 = scalar_lea.vmem %s5, %s1157
      $region64: #{plane_height_loss.1} parent=51 // pred_fallthru
        _
    $region52: #{plane_height_loss.1} parent=5 // pred_fallthru
      _
  $region6: #{plane_height_loss.1} parent=0 // loop_footer
    %s16 = sadd.s32 1, %s12
  $region7: #{plane_height_loss.1} parent=0 // loop_footer_branch
    %11 = sbr.rel target = $region3
  $region8: #{plane_height_loss.1} parent=0 // loop_exit
    _

</llo_original>
